<compile_context>
chip_gen: v7x
topology: tpu7x:2x2x1
jax: 0.10.0
libtpu: 0.0.40
codegen_flags: <defaults>
</compile_context>

<pallas_src>
import jax
import jax.numpy as jnp
from jax.experimental import pallas as pl
from jax.experimental.pallas import tpu as pltpu


P_DIM = 1000  # width of the DeepONet "common" output (fixed by the module)
_HI = jax.lax.Precision.HIGHEST

# A(m,k) x B(n,k) -> (m,n): contract both minor dims (transposed-RHS matmul).
_DN_T = (((1,), (1,)), ((), ()))


# --------------------------------------------------------------------------- #
# Kernel
# --------------------------------------------------------------------------- #
def _deeponet_kernel(bi_ref, ti_ref,              # batch-tiled inputs
                     m_ref, vt_ref,               # contracted branch head
                     w1_ref, b1_ref,              # trunk layer 1
                     w2_ref, b2_ref,              # trunk layer 2
                     w3_ref, b3_ref,              # trunk layer 3
                     w4_ref, b4_ref,              # trunk layer 4
                     o_ref):                      # output row [1, tm]
    f32 = jnp.float32

    # --- trunk hidden stack -------------------------------------------------
    # Layer 1 has a tiny contraction dim (trunk_features, e.g. 2); a K=2 MXU
    # matmul wastes the systolic depth, so use lane-broadcast FMAs on the VPU.
    ti = ti_ref[...]
    t = b1_ref[...]                                   # (1, C) — broadcasts up
    for k in range(ti_ref.shape[1]):                  # static, tiny trip count
        t = t + ti[:, k:k + 1] * w1_ref[k:k + 1, :]
    t = jnp.tanh(t)
    t = jnp.tanh(jnp.dot(t, w2_ref[...], preferred_element_type=f32) + b2_ref[...])
    t = jnp.tanh(jnp.dot(t, w3_ref[...], preferred_element_type=f32) + b3_ref[...])
    t = jnp.tanh(jnp.dot(t, w4_ref[...], preferred_element_type=f32) + b4_ref[...])

    # --- contracted bilinear head --------------------------------------------
    # out[i] = sum_c (bi@M)[i,c] * t[i,c] + (bi.v)[i]
    bi = bi_ref[...]
    bm = jnp.dot(bi, m_ref[...], preferred_element_type=f32)     # (tm, C)
    prod = bm * t                                                # (tm, C)

    # Produce the result directly as a lane-dense (1, tm) row:
    #   row[0, i] = sum_c prod[i, c]   (ones @ prod^T, MXU is otherwise idle)
    ones_row = jnp.ones((1, prod.shape[1]), f32)
    row = jax.lax.dot_general(ones_row, prod, _DN_T,
                              preferred_element_type=f32)        # (1, tm)
    #   + bias term: row_b[0, i] = sum_f v[f] * bi[i, f]
    row = row + jax.lax.dot_general(vt_ref[...], bi, _DN_T,
                                    preferred_element_type=f32)  # (1, tm)
    o_ref[...] = row


# --------------------------------------------------------------------------- #
# Wrapper
# --------------------------------------------------------------------------- #
def prepare_params(params):
    """Contract bw / w5 / b5 / last_layer_weights into the kernel operands.

    Exact algebraic rewrite of the bilinear head (done once, outside the
    kernel); only the summation order changes.
    """
    w5_lw = params["w5"] * params["lw"]                                   # [C, 1000]
    m = jnp.dot(params["bw"], w5_lw.T, precision=_HI)                     # [Fb, C]
    vt = jnp.dot(params["b5"] * params["lw"], params["bw"].T, precision=_HI)  # [1, Fb]
    return {
        "m": m, "vt": vt,
        "w1": params["w1"], "b1": params["b1"],
        "w2": params["w2"], "b2": params["b2"],
        "w3": params["w3"], "b3": params["b3"],
        "w4": params["w4"], "b4": params["b4"],
    }


def deeponet_forward(branch_input, trunk_input, kparams, *, tm=512):
    """Batched DeepONet forward. kparams comes from prepare_params()."""
    B, Fb = branch_input.shape
    Ft = trunk_input.shape[1]
    C = kparams["m"].shape[1]

    # Lane-dense output rows require tm to be a multiple of 128.
    tm = max(128, (int(tm) // 128) * 128)
    grid_n = pl.cdiv(B, tm)
    # v7x: the ("parallel",) grid axis is sharded over two TensorCores; prefer
    # an even step count so neither core idles (no effect on v5e/v6e).
    while grid_n > 1 and grid_n % 2 == 1 and tm > 128:
        tm -= 128
        grid_n = pl.cdiv(B, tm)
    Bp = grid_n * tm  # lane extent of the (1, Bp) output; rows >= B discarded.

    def batch_spec(feat):
        return pl.BlockSpec((tm, feat), lambda i: (i, 0))

    def weight_spec(shape):
        return pl.BlockSpec(shape, lambda i: (0, 0))

    flops = int(2 * B * (Ft * C + 3 * C * C + Fb * C + Fb + 2 * C))
    transcendentals = int(4 * B * C)
    bytes_accessed = int(4 * (B * (Fb + Ft) + Bp
                              + Fb * C + Fb + Ft * C + 3 * C * C + 4 * C))

    out = pl.pallas_call(
        _deeponet_kernel,
        out_shape=jax.ShapeDtypeStruct((1, Bp), jnp.float32),
        grid_spec=pltpu.PrefetchScalarGridSpec(
            num_scalar_prefetch=0,
            grid=(grid_n,),
            in_specs=[
                batch_spec(Fb),            # branch_input tile (tm, Fb)
                batch_spec(Ft),            # trunk_input tile  (tm, Ft)
                weight_spec((Fb, C)),      # M
                weight_spec((1, Fb)),      # v^T
                weight_spec((Ft, C)), weight_spec((1, C)),   # w1, b1
                weight_spec((C, C)),  weight_spec((1, C)),   # w2, b2
                weight_spec((C, C)),  weight_spec((1, C)),   # w3, b3
                weight_spec((C, C)),  weight_spec((1, C)),   # w4, b4
            ],
            out_specs=pl.BlockSpec((1, tm), lambda i: (0, i)),  # lane-dense row
        ),
        compiler_params=pltpu.CompilerParams(
            dimension_semantics=("parallel",)),
        cost_estimate=pl.CostEstimate(
            flops=flops,
            transcendentals=transcendentals,
            bytes_accessed=bytes_accessed),
    )(branch_input, trunk_input,
      kparams["m"], kparams["vt"],
      kparams["w1"], kparams["b1"],
      kparams["w2"], kparams["b2"],
      kparams["w3"], kparams["b3"],
      kparams["w4"], kparams["b4"])
    # Rows beyond B (partial last block) contain garbage from padded reads;
    # they never mix with valid rows (all ops are row-independent) — slice off.
    return out[0, :B][:, None]


# --------------------------------------------------------------------------- #
# Parameter init (torch.nn.Linear-style) and pure-JAX reference
# --------------------------------------------------------------------------- #
def init_params(key, branch_features, trunk_features, common_features):
    """Uniform(-1/sqrt(fan_in), 1/sqrt(fan_in)) like torch Linear; randn for
    last_layer_weights. Linear weights stored transposed as [in, out]."""
    keys = jax.random.split(key, 12)

    def lin_w(k, fan_in, fan_out):
        bound = 1.0 / jnp.sqrt(jnp.float32(fan_in))
        return jax.random.uniform(k, (fan_in, fan_out), jnp.float32, -bound, bound)

    def lin_b(k, fan_in, fan_out):
        bound = 1.0 / jnp.sqrt(jnp.float32(fan_in))
        return jax.random.uniform(k, (1, fan_out), jnp.float32, -bound, bound)

    C = common_features
    return {
        "bw": lin_w(keys[0], branch_features, P_DIM),
        "w1": lin_w(keys[1], trunk_features, C), "b1": lin_b(keys[2], trunk_features, C),
        "w2": lin_w(keys[3], C, C),              "b2": lin_b(keys[4], C, C),
        "w3": lin_w(keys[5], C, C),              "b3": lin_b(keys[6], C, C),
        "w4": lin_w(keys[7], C, C),              "b4": lin_b(keys[8], C, C),
        "w5": lin_w(keys[9], C, P_DIM),          "b5": lin_b(keys[10], C, P_DIM),
        "lw": jax.random.normal(keys[11], (1, P_DIM), jnp.float32),
    }


def deeponet_reference(branch_input, trunk_input, params):
    """Pure-JAX reference with the ORIGINAL (uncontracted) module semantics."""
    branch = jnp.dot(branch_input, params["bw"], precision=_HI)
    t = jnp.tanh(jnp.dot(trunk_input, params["w1"], precision=_HI) + params["b1"])
    t = jnp.tanh(jnp.dot(t, params["w2"], precision=_HI) + params["b2"])
    t = jnp.tanh(jnp.dot(t, params["w3"], precision=_HI) + params["b3"])
    t = jnp.tanh(jnp.dot(t, params["w4"], precision=_HI) + params["b4"])
    trunk = jnp.dot(t, params["w5"], precision=_HI) + params["b5"]
    return jnp.sum(branch * trunk * params["lw"], axis=1, keepdims=True)


# --------------------------------------------------------------------------- #
if __name__ == "__main__":
    key = jax.random.PRNGKey(0)
    k_param, k_branch, k_trunk = jax.random.split(key, 3)

    # laplace2D: 32-sensor branch input, 2-D trunk coordinates, C=32.
    # batch=300 with tm=256 -> grid of 2 (even, balances v7x's two cores) and
    # exercises the partial last block (rows 256..299 valid, rest discarded).
    batch = 300
    branch_features = 32
    trunk_features = 2
    common_features = 32

    params = init_params(k_param, branch_features, trunk_features, common_features)
    kparams = prepare_params(params)

    branch_input = jax.random.normal(k_branch, (batch, branch_features), jnp.float32)
    trunk_input = jax.random.normal(k_trunk, (batch, trunk_features), jnp.float32)

    out = deeponet_forward(branch_input, trunk_input, kparams, tm=256)
    out = jax.block_until_ready(out)

    ref = deeponet_reference(branch_input, trunk_input, params)
    assert out.shape == (batch, 1)
    # The kernel runs its matmuls at default MXU precision and contracts the
    # 1000-wide bilinear head in a different summation order than the f32
    # HIGHEST-precision reference, so compare at a small fraction of the
    # output scale (any algorithmic bug would be O(100%) off).
    max_err = float(jnp.max(jnp.abs(out - ref)))
    scale = float(jnp.max(jnp.abs(ref)))
    assert max_err <= 2e-2 * scale + 1e-3, (max_err, scale)

    print("KERNEL_OK")
</pallas_src>

<mosaic_0001>
module attributes {stable_mosaic.version = 11 : i64} {
  func.func @_deeponet_kernel(%arg0: i32, %arg1: memref<256x32xf32, #tpu.memory_space<vmem>>, %arg2: memref<256x2xf32, #tpu.memory_space<vmem>>, %arg3: memref<32x32xf32, #tpu.memory_space<vmem>>, %arg4: memref<1x32xf32, #tpu.memory_space<vmem>>, %arg5: memref<2x32xf32, #tpu.memory_space<vmem>>, %arg6: memref<1x32xf32, #tpu.memory_space<vmem>>, %arg7: memref<32x32xf32, #tpu.memory_space<vmem>>, %arg8: memref<1x32xf32, #tpu.memory_space<vmem>>, %arg9: memref<32x32xf32, #tpu.memory_space<vmem>>, %arg10: memref<1x32xf32, #tpu.memory_space<vmem>>, %arg11: memref<32x32xf32, #tpu.memory_space<vmem>>, %arg12: memref<1x32xf32, #tpu.memory_space<vmem>>, %arg13: memref<1x256xf32, #tpu.memory_space<vmem>>) attributes {dimension_semantics = [#tpu.dimension_semantics<parallel>], iteration_bounds = array<i64: 2>, scalar_prefetch = 0 : i64, scratch_operands = 0 : i64, tpu.core_type = #tpu.core_type<tc>, window_params = [{transform_indices = @transform_0, window_bounds = array<i64: 256, 32>}, {transform_indices = @transform_1, window_bounds = array<i64: 256, 2>}, {pipeline_mode = #tpu.pipeline_mode<synchronous>, transform_indices = @transform_2, window_bounds = array<i64: 32, 32>}, {pipeline_mode = #tpu.pipeline_mode<synchronous>, transform_indices = @transform_3, window_bounds = array<i64: 1, 32>}, {pipeline_mode = #tpu.pipeline_mode<synchronous>, transform_indices = @transform_4, window_bounds = array<i64: 2, 32>}, {pipeline_mode = #tpu.pipeline_mode<synchronous>, transform_indices = @transform_5, window_bounds = array<i64: 1, 32>}, {pipeline_mode = #tpu.pipeline_mode<synchronous>, transform_indices = @transform_6, window_bounds = array<i64: 32, 32>}, {pipeline_mode = #tpu.pipeline_mode<synchronous>, transform_indices = @transform_7, window_bounds = array<i64: 1, 32>}, {pipeline_mode = #tpu.pipeline_mode<synchronous>, transform_indices = @transform_8, window_bounds = array<i64: 32, 32>}, {pipeline_mode = #tpu.pipeline_mode<synchronous>, transform_indices = @transform_9, window_bounds = array<i64: 1, 32>}, {pipeline_mode = #tpu.pipeline_mode<synchronous>, transform_indices = @transform_10, window_bounds = array<i64: 32, 32>}, {pipeline_mode = #tpu.pipeline_mode<synchronous>, transform_indices = @transform_11, window_bounds = array<i64: 1, 32>}, {transform_indices = @transform_12, window_bounds = array<i64: 1, 256>}]} {
    %c0 = arith.constant 0 : index
    %c0_0 = arith.constant 0 : index
    %0 = vector.load %arg2[%c0, %c0_0] : memref<256x2xf32, #tpu.memory_space<vmem>>, vector<256x2xf32>
    %c0_1 = arith.constant 0 : index
    %c0_2 = arith.constant 0 : index
    %1 = vector.load %arg6[%c0_1, %c0_2] : memref<1x32xf32, #tpu.memory_space<vmem>>, vector<1x32xf32>
    %2 = vector.extract_strided_slice %0 {offsets = [0, 0], sizes = [256, 1], strides = [1, 1]} : vector<256x2xf32> to vector<256x1xf32>
    %c0_3 = arith.constant 0 : index
    %c0_4 = arith.constant 0 : index
    %3 = vector.load %arg5[%c0_3, %c0_4] : memref<2x32xf32, #tpu.memory_space<vmem>>, vector<1x32xf32>
    %4 = vector.broadcast %2 : vector<256x1xf32> to vector<256x32xf32>
    %5 = vector.broadcast %3 : vector<1x32xf32> to vector<256x32xf32>
    %6 = arith.mulf %4, %5 : vector<256x32xf32>
    %7 = vector.broadcast %1 : vector<1x32xf32> to vector<256x32xf32>
    %8 = arith.addf %7, %6 : vector<256x32xf32>
    %9 = vector.extract_strided_slice %0 {offsets = [0, 1], sizes = [256, 1], strides = [1, 1]} : vector<256x2xf32> to vector<256x1xf32>
    %c1 = arith.constant 1 : index
    %c0_5 = arith.constant 0 : index
    %10 = vector.load %arg5[%c1, %c0_5] : memref<2x32xf32, #tpu.memory_space<vmem>>, vector<1x32xf32>
    %11 = vector.broadcast %9 : vector<256x1xf32> to vector<256x32xf32>
    %12 = vector.broadcast %10 : vector<1x32xf32> to vector<256x32xf32>
    %13 = arith.mulf %11, %12 : vector<256x32xf32>
    %14 = arith.addf %8, %13 : vector<256x32xf32>
    %15 = math.tanh %14 : vector<256x32xf32>
    %c0_6 = arith.constant 0 : index
    %c0_7 = arith.constant 0 : index
    %16 = vector.load %arg7[%c0_6, %c0_7] : memref<32x32xf32, #tpu.memory_space<vmem>>, vector<32x32xf32>
    %cst = arith.constant dense<0.000000e+00> : vector<256x32xf32>
    %17 = tpu.matmul %15, %16, %cst {dimension_numbers = #tpu.dot_dimension_numbers<[1], [0], [0], [1], [0, 0, 1, 1], [], []>} : vector<256x32xf32>, vector<32x32xf32>, vector<256x32xf32> -> vector<256x32xf32>
    %c0_8 = arith.constant 0 : index
    %c0_9 = arith.constant 0 : index
    %18 = vector.load %arg8[%c0_8, %c0_9] : memref<1x32xf32, #tpu.memory_space<vmem>>, vector<1x32xf32>
    %19 = vector.broadcast %18 : vector<1x32xf32> to vector<256x32xf32>
    %20 = arith.addf %17, %19 : vector<256x32xf32>
    %21 = math.tanh %20 : vector<256x32xf32>
    %c0_10 = arith.constant 0 : index
    %c0_11 = arith.constant 0 : index
    %22 = vector.load %arg9[%c0_10, %c0_11] : memref<32x32xf32, #tpu.memory_space<vmem>>, vector<32x32xf32>
    %cst_12 = arith.constant dense<0.000000e+00> : vector<256x32xf32>
    %23 = tpu.matmul %21, %22, %cst_12 {dimension_numbers = #tpu.dot_dimension_numbers<[1], [0], [0], [1], [0, 0, 1, 1], [], []>} : vector<256x32xf32>, vector<32x32xf32>, vector<256x32xf32> -> vector<256x32xf32>
    %c0_13 = arith.constant 0 : index
    %c0_14 = arith.constant 0 : index
    %24 = vector.load %arg10[%c0_13, %c0_14] : memref<1x32xf32, #tpu.memory_space<vmem>>, vector<1x32xf32>
    %25 = vector.broadcast %24 : vector<1x32xf32> to vector<256x32xf32>
    %26 = arith.addf %23, %25 : vector<256x32xf32>
    %27 = math.tanh %26 : vector<256x32xf32>
    %c0_15 = arith.constant 0 : index
    %c0_16 = arith.constant 0 : index
    %28 = vector.load %arg11[%c0_15, %c0_16] : memref<32x32xf32, #tpu.memory_space<vmem>>, vector<32x32xf32>
    %cst_17 = arith.constant dense<0.000000e+00> : vector<256x32xf32>
    %29 = tpu.matmul %27, %28, %cst_17 {dimension_numbers = #tpu.dot_dimension_numbers<[1], [0], [0], [1], [0, 0, 1, 1], [], []>} : vector<256x32xf32>, vector<32x32xf32>, vector<256x32xf32> -> vector<256x32xf32>
    %c0_18 = arith.constant 0 : index
    %c0_19 = arith.constant 0 : index
    %30 = vector.load %arg12[%c0_18, %c0_19] : memref<1x32xf32, #tpu.memory_space<vmem>>, vector<1x32xf32>
    %31 = vector.broadcast %30 : vector<1x32xf32> to vector<256x32xf32>
    %32 = arith.addf %29, %31 : vector<256x32xf32>
    %33 = math.tanh %32 : vector<256x32xf32>
    %c0_20 = arith.constant 0 : index
    %c0_21 = arith.constant 0 : index
    %34 = vector.load %arg1[%c0_20, %c0_21] : memref<256x32xf32, #tpu.memory_space<vmem>>, vector<256x32xf32>
    %c0_22 = arith.constant 0 : index
    %c0_23 = arith.constant 0 : index
    %35 = vector.load %arg3[%c0_22, %c0_23] : memref<32x32xf32, #tpu.memory_space<vmem>>, vector<32x32xf32>
    %cst_24 = arith.constant dense<0.000000e+00> : vector<256x32xf32>
    %36 = tpu.matmul %34, %35, %cst_24 {dimension_numbers = #tpu.dot_dimension_numbers<[1], [0], [0], [1], [0, 0, 1, 1], [], []>} : vector<256x32xf32>, vector<32x32xf32>, vector<256x32xf32> -> vector<256x32xf32>
    %37 = arith.mulf %36, %33 : vector<256x32xf32>
    %cst_25 = arith.constant 1.000000e+00 : f32
    %38 = vector.broadcast %cst_25 : f32 to vector<1x32xf32>
    %cst_26 = arith.constant dense<0.000000e+00> : vector<1x256xf32>
    %39 = tpu.matmul %38, %37, %cst_26 {dimension_numbers = #tpu.dot_dimension_numbers<[1], [1], [0], [0], [0, 0, 1, 0], [], []>} : vector<1x32xf32>, vector<256x32xf32>, vector<1x256xf32> -> vector<1x256xf32>
    %c0_27 = arith.constant 0 : index
    %c0_28 = arith.constant 0 : index
    %40 = vector.load %arg4[%c0_27, %c0_28] : memref<1x32xf32, #tpu.memory_space<vmem>>, vector<1x32xf32>
    %cst_29 = arith.constant dense<0.000000e+00> : vector<1x256xf32>
    %41 = tpu.matmul %40, %34, %cst_29 {dimension_numbers = #tpu.dot_dimension_numbers<[1], [1], [0], [0], [0, 0, 1, 0], [], []>} : vector<1x32xf32>, vector<256x32xf32>, vector<1x256xf32> -> vector<1x256xf32>
    %42 = arith.addf %39, %41 : vector<1x256xf32>
    %c0_30 = arith.constant 0 : index
    %c0_31 = arith.constant 0 : index
    %43 = vector.load %arg13[%c0_30, %c0_31] : memref<1x256xf32, #tpu.memory_space<vmem>>, vector<1x256xf32>
    tpu.vector_store %arg13[%c0_30, %c0_31], %42 {strides = array<i32>} : memref<1x256xf32, #tpu.memory_space<vmem>>, vector<1x256xf32>,
    return
  }
  func.func @transform_0(%arg0: i32) -> (i32, i32) {
    %c0_i32 = arith.constant 0 : i32
    %c0_i32_0 = arith.constant 0 : i32
    return %arg0, %c0_i32 : i32, i32
  }
  func.func @transform_1(%arg0: i32) -> (i32, i32) {
    %c0_i32 = arith.constant 0 : i32
    %c0_i32_0 = arith.constant 0 : i32
    return %arg0, %c0_i32 : i32, i32
  }
  func.func @transform_2(%arg0: i32) -> (i32, i32) {
    %c0_i32 = arith.constant 0 : i32
    %c0_i32_0 = arith.constant 0 : i32
    %c0_i32_1 = arith.constant 0 : i32
    return %c0_i32, %c0_i32_0 : i32, i32
  }
  func.func @transform_3(%arg0: i32) -> (i32, i32) {
    %c0_i32 = arith.constant 0 : i32
    %c0_i32_0 = arith.constant 0 : i32
    %c0_i32_1 = arith.constant 0 : i32
    return %c0_i32, %c0_i32_0 : i32, i32
  }
  func.func @transform_4(%arg0: i32) -> (i32, i32) {
    %c0_i32 = arith.constant 0 : i32
    %c0_i32_0 = arith.constant 0 : i32
    %c0_i32_1 = arith.constant 0 : i32
    return %c0_i32, %c0_i32_0 : i32, i32
  }
  func.func @transform_5(%arg0: i32) -> (i32, i32) {
    %c0_i32 = arith.constant 0 : i32
    %c0_i32_0 = arith.constant 0 : i32
    %c0_i32_1 = arith.constant 0 : i32
    return %c0_i32, %c0_i32_0 : i32, i32
  }
  func.func @transform_6(%arg0: i32) -> (i32, i32) {
    %c0_i32 = arith.constant 0 : i32
    %c0_i32_0 = arith.constant 0 : i32
    %c0_i32_1 = arith.constant 0 : i32
    return %c0_i32, %c0_i32_0 : i32, i32
  }
  func.func @transform_7(%arg0: i32) -> (i32, i32) {
    %c0_i32 = arith.constant 0 : i32
    %c0_i32_0 = arith.constant 0 : i32
    %c0_i32_1 = arith.constant 0 : i32
    return %c0_i32, %c0_i32_0 : i32, i32
  }
  func.func @transform_8(%arg0: i32) -> (i32, i32) {
    %c0_i32 = arith.constant 0 : i32
    %c0_i32_0 = arith.constant 0 : i32
    %c0_i32_1 = arith.constant 0 : i32
    return %c0_i32, %c0_i32_0 : i32, i32
  }
  func.func @transform_9(%arg0: i32) -> (i32, i32) {
    %c0_i32 = arith.constant 0 : i32
    %c0_i32_0 = arith.constant 0 : i32
    %c0_i32_1 = arith.constant 0 : i32
    return %c0_i32, %c0_i32_0 : i32, i32
  }
  func.func @transform_10(%arg0: i32) -> (i32, i32) {
    %c0_i32 = arith.constant 0 : i32
    %c0_i32_0 = arith.constant 0 : i32
    %c0_i32_1 = arith.constant 0 : i32
    return %c0_i32, %c0_i32_0 : i32, i32
  }
  func.func @transform_11(%arg0: i32) -> (i32, i32) {
    %c0_i32 = arith.constant 0 : i32
    %c0_i32_0 = arith.constant 0 : i32
    %c0_i32_1 = arith.constant 0 : i32
    return %c0_i32, %c0_i32_0 : i32, i32
  }
  func.func @transform_12(%arg0: i32) -> (i32, i32) {
    %c0_i32 = arith.constant 0 : i32
    %c0_i32_0 = arith.constant 0 : i32
    return %c0_i32, %arg0 : i32, i32
  }
}

</mosaic_0001>

<llo_original>
// kernel: tpu_custom_call.1
$region0: #{tpu_custom_call.1}
  #allocation0 [shape = 'u32[]', space=smem, size = 0x4, offset = 0x4, fixed_abs, tag = 'smem constant byte address 0x4 - core index']
  #allocation1 [shape = 'u32[144,128]{1,0:T(1,128)}', space=vmem, size = 0x12000, scoped, tag = 'internal scratch']
  %s0 = inlined_call_operand.vmem [shape: f32[300,32], index: 0, kind: input, shape index: {}]
  %s1 = inlined_call_operand.vmem [shape: f32[300,2], index: 1, kind: input, shape index: {}]
  %s2 = inlined_call_operand.vmem [shape: f32[32,32], index: 2, kind: input, shape index: {}]
  %s3 = inlined_call_operand.vmem [shape: f32[1,32], index: 3, kind: input, shape index: {}]
  %s4 = inlined_call_operand.vmem [shape: f32[2,32], index: 4, kind: input, shape index: {}]
  %s5 = inlined_call_operand.vmem [shape: f32[1,32], index: 5, kind: input, shape index: {}]
  %s6 = inlined_call_operand.vmem [shape: f32[32,32], index: 6, kind: input, shape index: {}]
  %s7 = inlined_call_operand.vmem [shape: f32[1,32], index: 7, kind: input, shape index: {}]
  %s8 = inlined_call_operand.vmem [shape: f32[32,32], index: 8, kind: input, shape index: {}]
  %s9 = inlined_call_operand.vmem [shape: f32[1,32], index: 9, kind: input, shape index: {}]
  %s10 = inlined_call_operand.vmem [shape: f32[32,32], index: 10, kind: input, shape index: {}]
  %s11 = inlined_call_operand.vmem [shape: f32[1,32], index: 11, kind: input, shape index: {}]
  %s12 = inlined_call_operand.hbm [shape: f32[1,512], index: 12, kind: output, shape index: {}]
  %s13 = sld [smem:[#allocation0]]
  $region81: #{tpu_custom_call.1} parent=0
    _
  %s15 = ssub.s32 1, %s13
  %s16 = scalar_select 0, %s15, %s13
  $region1: #{tpu_custom_call.1} parent=0
    #allocation2 [shape = 'u8[2048]{0}', space=vmem, size = 0x800, scoped, tag = 'output window, operand 0']
    #allocation3 [shape = 's32[2]{0}', space=sflag, size = 0x8, scoped, tag = 'scoped memory for tpu_custom_call.1']
    %17 = vsyncpa [#allocation3], 0
    %s18 = scalar_lea.sflag [#allocation3], 1
    %19 = vsyncpa %s18, 0
    loop: start=0, step=1, limit=4
    $region2: #{tpu_custom_call.1} parent=1 // loop_pre_header
      _
    $region3: #{tpu_custom_call.1} parent=1 // loop_header
      %s21 = sphi 0, %s25
      %p22 = scmp.ge.s32.totalorder %s21, 4
      %s31 = sphi 0, %s33
      %s34 = sphi 0, %s31
      %s35 = sphi 0, %s34
      %s51 = sphi 0, %s35
      %s57 = sphi 0, %s59
      %s60 = sphi 0, %s57
      %s61 = sphi 0, %s60
      %s77 = sphi 0, %s61
      %s81 = sphi 0, %s81
      %s83 = sphi 0, %s81
      %s84 = sphi 0, %s83
      %s98 = sphi 0, %s84
      %s102 = sphi 0, %s102
      %s104 = sphi 0, %s102
      %s105 = sphi 0, %s104
      %s119 = sphi 0, %s105
      %s123 = sphi 0, %s123
      %s125 = sphi 0, %s123
      %s126 = sphi 0, %s125
      %s140 = sphi 0, %s126
      %s144 = sphi 0, %s144
      %s146 = sphi 0, %s144
      %s147 = sphi 0, %s146
      %s161 = sphi 0, %s147
      %s165 = sphi 0, %s165
      %s167 = sphi 0, %s165
      %s168 = sphi 0, %s167
      %s182 = sphi 0, %s168
      %s186 = sphi 0, %s186
      %s188 = sphi 0, %s186
      %s189 = sphi 0, %s188
      %s203 = sphi 0, %s189
      %s207 = sphi 0, %s207
      %s209 = sphi 0, %s207
      %s210 = sphi 0, %s209
      %s224 = sphi 0, %s210
      %s228 = sphi 0, %s228
      %s230 = sphi 0, %s228
      %s231 = sphi 0, %s230
      %s245 = sphi 0, %s231
      %s249 = sphi 0, %s249
      %s251 = sphi 0, %s249
      %s252 = sphi 0, %s251
      %s266 = sphi 0, %s252
      %s270 = sphi 0, %s270
      %s272 = sphi 0, %s270
      %s273 = sphi 0, %s272
      %s287 = sphi 0, %s273
      %s293 = sphi 0, %s295
      %s296 = sphi 0, %s293
      %s297 = sphi 0, %s296
      %s313 = sphi 0, %s297
    $region4: #{tpu_custom_call.1} parent=1 // loop_header_branch
      %24 = sbr.rel (%p22) target = $region8
    $region5: #{tpu_custom_call.1} parent=1 // loop_body
      %s26 = ssub.s32 %s21, 1
      %s27 = ssub.s32 %s21, 2
      %s28 = sadd.s32 %s21, 1
      %s29 = ssub.s32 %s21, %s28
      %p30 = scmp.eq.s32.totalorder %s29, 0
      %s32 = sadd.s32 %s31, 1
      %s33 = scalar_select %p30, %s31, %s32
      %p36 = pneg %p30
      %p37 = scmp.eq.s32.totalorder %s21, 1
      %p38 = por %p36, %p37
      %p39 = scmp.ne.s32.totalorder %s31, %s34
      %p40 = scmp.eq.s32.totalorder %s21, 0
      %p41 = por %p39, %p40
      %p42 = scmp.ne.s32.totalorder %s31, %s34
      %p43 = scmp.eq.s32.totalorder %s26, 1
      %p44 = por %p42, %p43
      %p45 = scmp.ne.s32.totalorder %s34, %s35
      %p46 = scmp.eq.s32.totalorder %s26, 0
      %p47 = por %p45, %p46
      %p48 = scmp.ne.s32.totalorder %s34, %s35
      %p49 = scmp.eq.s32.totalorder %s27, 1
      %p50 = por %p48, %p49
      %p52 = scmp.ne.s32.totalorder %s35, %s51
      %p53 = scmp.eq.s32.totalorder %s27, 0
      %p54 = por %p52, %p53
      %s55 = ssub.s32 %s21, %s28
      %p56 = scmp.eq.s32.totalorder %s55, 0
      %s58 = sadd.s32 %s57, 1
      %s59 = scalar_select %p56, %s57, %s58
      %p62 = pneg %p56
      %p63 = scmp.eq.s32.totalorder %s21, 1
      %p64 = por %p62, %p63
      %p65 = scmp.ne.s32.totalorder %s57, %s60
      %p66 = scmp.eq.s32.totalorder %s21, 0
      %p67 = por %p65, %p66
      %p68 = scmp.ne.s32.totalorder %s57, %s60
      %p69 = scmp.eq.s32.totalorder %s26, 1
      %p70 = por %p68, %p69
      %p71 = scmp.ne.s32.totalorder %s60, %s61
      %p72 = scmp.eq.s32.totalorder %s26, 0
      %p73 = por %p71, %p72
      %p74 = scmp.ne.s32.totalorder %s60, %s61
      %p75 = scmp.eq.s32.totalorder %s27, 1
      %p76 = por %p74, %p75
      %p78 = scmp.ne.s32.totalorder %s61, %s77
      %p79 = scmp.eq.s32.totalorder %s27, 0
      %p80 = por %p78, %p79
      %s82 = sadd.s32 %s81, 1
      %p85 = scmp.eq.s32.totalorder %s21, 1
      %p86 = scmp.ne.s32.totalorder %s81, %s83
      %p87 = scmp.eq.s32.totalorder %s21, 0
      %p88 = por %p86, %p87
      %p89 = scmp.ne.s32.totalorder %s81, %s83
      %p90 = scmp.eq.s32.totalorder %s26, 1
      %p91 = por %p89, %p90
      %p92 = scmp.ne.s32.totalorder %s83, %s84
      %p93 = scmp.eq.s32.totalorder %s26, 0
      %p94 = por %p92, %p93
      %p95 = scmp.ne.s32.totalorder %s83, %s84
      %p96 = scmp.eq.s32.totalorder %s27, 1
      %p97 = por %p95, %p96
      %p99 = scmp.ne.s32.totalorder %s84, %s98
      %p100 = scmp.eq.s32.totalorder %s27, 0
      %p101 = por %p99, %p100
      %s103 = sadd.s32 %s102, 1
      %p106 = scmp.eq.s32.totalorder %s21, 1
      %p107 = scmp.ne.s32.totalorder %s102, %s104
      %p108 = scmp.eq.s32.totalorder %s21, 0
      %p109 = por %p107, %p108
      %p110 = scmp.ne.s32.totalorder %s102, %s104
      %p111 = scmp.eq.s32.totalorder %s26, 1
      %p112 = por %p110, %p111
      %p113 = scmp.ne.s32.totalorder %s104, %s105
      %p114 = scmp.eq.s32.totalorder %s26, 0
      %p115 = por %p113, %p114
      %p116 = scmp.ne.s32.totalorder %s104, %s105
      %p117 = scmp.eq.s32.totalorder %s27, 1
      %p118 = por %p116, %p117
      %p120 = scmp.ne.s32.totalorder %s105, %s119
      %p121 = scmp.eq.s32.totalorder %s27, 0
      %p122 = por %p120, %p121
      %s124 = sadd.s32 %s123, 1
      %p127 = scmp.eq.s32.totalorder %s21, 1
      %p128 = scmp.ne.s32.totalorder %s123, %s125
      %p129 = scmp.eq.s32.totalorder %s21, 0
      %p130 = por %p128, %p129
      %p131 = scmp.ne.s32.totalorder %s123, %s125
      %p132 = scmp.eq.s32.totalorder %s26, 1
      %p133 = por %p131, %p132
      %p134 = scmp.ne.s32.totalorder %s125, %s126
      %p135 = scmp.eq.s32.totalorder %s26, 0
      %p136 = por %p134, %p135
      %p137 = scmp.ne.s32.totalorder %s125, %s126
      %p138 = scmp.eq.s32.totalorder %s27, 1
      %p139 = por %p137, %p138
      %p141 = scmp.ne.s32.totalorder %s126, %s140
      %p142 = scmp.eq.s32.totalorder %s27, 0
      %p143 = por %p141, %p142
      %s145 = sadd.s32 %s144, 1
      %p148 = scmp.eq.s32.totalorder %s21, 1
      %p149 = scmp.ne.s32.totalorder %s144, %s146
      %p150 = scmp.eq.s32.totalorder %s21, 0
      %p151 = por %p149, %p150
      %p152 = scmp.ne.s32.totalorder %s144, %s146
      %p153 = scmp.eq.s32.totalorder %s26, 1
      %p154 = por %p152, %p153
      %p155 = scmp.ne.s32.totalorder %s146, %s147
      %p156 = scmp.eq.s32.totalorder %s26, 0
      %p157 = por %p155, %p156
      %p158 = scmp.ne.s32.totalorder %s146, %s147
      %p159 = scmp.eq.s32.totalorder %s27, 1
      %p160 = por %p158, %p159
      %p162 = scmp.ne.s32.totalorder %s147, %s161
      %p163 = scmp.eq.s32.totalorder %s27, 0
      %p164 = por %p162, %p163
      %s166 = sadd.s32 %s165, 1
      %p169 = scmp.eq.s32.totalorder %s21, 1
      %p170 = scmp.ne.s32.totalorder %s165, %s167
      %p171 = scmp.eq.s32.totalorder %s21, 0
      %p172 = por %p170, %p171
      %p173 = scmp.ne.s32.totalorder %s165, %s167
      %p174 = scmp.eq.s32.totalorder %s26, 1
      %p175 = por %p173, %p174
      %p176 = scmp.ne.s32.totalorder %s167, %s168
      %p177 = scmp.eq.s32.totalorder %s26, 0
      %p178 = por %p176, %p177
      %p179 = scmp.ne.s32.totalorder %s167, %s168
      %p180 = scmp.eq.s32.totalorder %s27, 1
      %p181 = por %p179, %p180
      %p183 = scmp.ne.s32.totalorder %s168, %s182
      %p184 = scmp.eq.s32.totalorder %s27, 0
      %p185 = por %p183, %p184
      %s187 = sadd.s32 %s186, 1
      %p190 = scmp.eq.s32.totalorder %s21, 1
      %p191 = scmp.ne.s32.totalorder %s186, %s188
      %p192 = scmp.eq.s32.totalorder %s21, 0
      %p193 = por %p191, %p192
      %p194 = scmp.ne.s32.totalorder %s186, %s188
      %p195 = scmp.eq.s32.totalorder %s26, 1
      %p196 = por %p194, %p195
      %p197 = scmp.ne.s32.totalorder %s188, %s189
      %p198 = scmp.eq.s32.totalorder %s26, 0
      %p199 = por %p197, %p198
      %p200 = scmp.ne.s32.totalorder %s188, %s189
      %p201 = scmp.eq.s32.totalorder %s27, 1
      %p202 = por %p200, %p201
      %p204 = scmp.ne.s32.totalorder %s189, %s203
      %p205 = scmp.eq.s32.totalorder %s27, 0
      %p206 = por %p204, %p205
      %s208 = sadd.s32 %s207, 1
      %p211 = scmp.eq.s32.totalorder %s21, 1
      %p212 = scmp.ne.s32.totalorder %s207, %s209
      %p213 = scmp.eq.s32.totalorder %s21, 0
      %p214 = por %p212, %p213
      %p215 = scmp.ne.s32.totalorder %s207, %s209
      %p216 = scmp.eq.s32.totalorder %s26, 1
      %p217 = por %p215, %p216
      %p218 = scmp.ne.s32.totalorder %s209, %s210
      %p219 = scmp.eq.s32.totalorder %s26, 0
      %p220 = por %p218, %p219
      %p221 = scmp.ne.s32.totalorder %s209, %s210
      %p222 = scmp.eq.s32.totalorder %s27, 1
      %p223 = por %p221, %p222
      %p225 = scmp.ne.s32.totalorder %s210, %s224
      %p226 = scmp.eq.s32.totalorder %s27, 0
      %p227 = por %p225, %p226
      %s229 = sadd.s32 %s228, 1
      %p232 = scmp.eq.s32.totalorder %s21, 1
      %p233 = scmp.ne.s32.totalorder %s228, %s230
      %p234 = scmp.eq.s32.totalorder %s21, 0
      %p235 = por %p233, %p234
      %p236 = scmp.ne.s32.totalorder %s228, %s230
      %p237 = scmp.eq.s32.totalorder %s26, 1
      %p238 = por %p236, %p237
      %p239 = scmp.ne.s32.totalorder %s230, %s231
      %p240 = scmp.eq.s32.totalorder %s26, 0
      %p241 = por %p239, %p240
      %p242 = scmp.ne.s32.totalorder %s230, %s231
      %p243 = scmp.eq.s32.totalorder %s27, 1
      %p244 = por %p242, %p243
      %p246 = scmp.ne.s32.totalorder %s231, %s245
      %p247 = scmp.eq.s32.totalorder %s27, 0
      %p248 = por %p246, %p247
      %s250 = sadd.s32 %s249, 1
      %p253 = scmp.eq.s32.totalorder %s21, 1
      %p254 = scmp.ne.s32.totalorder %s249, %s251
      %p255 = scmp.eq.s32.totalorder %s21, 0
      %p256 = por %p254, %p255
      %p257 = scmp.ne.s32.totalorder %s249, %s251
      %p258 = scmp.eq.s32.totalorder %s26, 1
      %p259 = por %p257, %p258
      %p260 = scmp.ne.s32.totalorder %s251, %s252
      %p261 = scmp.eq.s32.totalorder %s26, 0
      %p262 = por %p260, %p261
      %p263 = scmp.ne.s32.totalorder %s251, %s252
      %p264 = scmp.eq.s32.totalorder %s27, 1
      %p265 = por %p263, %p264
      %p267 = scmp.ne.s32.totalorder %s252, %s266
      %p268 = scmp.eq.s32.totalorder %s27, 0
      %p269 = por %p267, %p268
      %s271 = sadd.s32 %s270, 1
      %p274 = scmp.eq.s32.totalorder %s21, 1
      %p275 = scmp.ne.s32.totalorder %s270, %s272
      %p276 = scmp.eq.s32.totalorder %s21, 0
      %p277 = por %p275, %p276
      %p278 = scmp.ne.s32.totalorder %s270, %s272
      %p279 = scmp.eq.s32.totalorder %s26, 1
      %p280 = por %p278, %p279
      %p281 = scmp.ne.s32.totalorder %s272, %s273
      %p282 = scmp.eq.s32.totalorder %s26, 0
      %p283 = por %p281, %p282
      %p284 = scmp.ne.s32.totalorder %s272, %s273
      %p285 = scmp.eq.s32.totalorder %s27, 1
      %p286 = por %p284, %p285
      %p288 = scmp.ne.s32.totalorder %s273, %s287
      %p289 = scmp.eq.s32.totalorder %s27, 0
      %p290 = por %p288, %p289
      %s291 = ssub.s32 %s21, %s28
      %p292 = scmp.eq.s32.totalorder %s291, 0
      %s294 = sadd.s32 %s293, 1
      %s295 = scalar_select %p292, %s293, %s294
      %p298 = pneg %p292
      %p299 = scmp.eq.s32.totalorder %s21, 1
      %p300 = por %p298, %p299
      %p301 = scmp.ne.s32.totalorder %s293, %s296
      %p302 = scmp.eq.s32.totalorder %s21, 0
      %p303 = por %p301, %p302
      %p304 = scmp.ne.s32.totalorder %s293, %s296
      %p305 = scmp.eq.s32.totalorder %s26, 1
      %p306 = por %p304, %p305
      %p307 = scmp.ne.s32.totalorder %s296, %s297
      %p308 = scmp.eq.s32.totalorder %s26, 0
      %p309 = por %p307, %p308
      %p310 = scmp.ne.s32.totalorder %s296, %s297
      %p311 = scmp.eq.s32.totalorder %s27, 1
      %p312 = por %p310, %p311
      %p314 = scmp.ne.s32.totalorder %s297, %s313
      %p315 = scmp.eq.s32.totalorder %s27, 0
      %p316 = por %p314, %p315
      %p317 = scmp.le.s32.totalorder 1, %s21
      %p318 = scmp.lt.s32.totalorder %s21, 3
      %p319 = pnand %p317, %p318
      %p320 = pneg %p319
      // Predicated region
      $region9: #{tpu_custom_call.1} parent=5 // pred_check
        _
      $region10: #{tpu_custom_call.1} parent=5 // pred_check_branch
        %322 = sbr.rel (%p319) target = $region12
      $region11: #{tpu_custom_call.1} parent=5 // pred_region
        %s323 = ssub.s32 %s21, 1
        // Predicated region
        $region13: #{tpu_custom_call.1} parent=11 // pred_check
          %p324 = pneg %p94
        $region14: #{tpu_custom_call.1} parent=11 // pred_check_branch
          %326 = sbr.rel (%p324) target = $region16
        $region15: #{tpu_custom_call.1} parent=11 // pred_region
          _
        $region16: #{tpu_custom_call.1} parent=11 // pred_fallthru
          _
        // Predicated region
        $region17: #{tpu_custom_call.1} parent=11 // pred_check
          %p327 = pneg %p115
        $region18: #{tpu_custom_call.1} parent=11 // pred_check_branch
          %329 = sbr.rel (%p327) target = $region20
        $region19: #{tpu_custom_call.1} parent=11 // pred_region
          _
        $region20: #{tpu_custom_call.1} parent=11 // pred_fallthru
          _
        // Predicated region
        $region21: #{tpu_custom_call.1} parent=11 // pred_check
          %p330 = pneg %p136
        $region22: #{tpu_custom_call.1} parent=11 // pred_check_branch
          %332 = sbr.rel (%p330) target = $region24
        $region23: #{tpu_custom_call.1} parent=11 // pred_region
          _
        $region24: #{tpu_custom_call.1} parent=11 // pred_fallthru
          _
        // Predicated region
        $region25: #{tpu_custom_call.1} parent=11 // pred_check
          %p333 = pneg %p157
        $region26: #{tpu_custom_call.1} parent=11 // pred_check_branch
          %335 = sbr.rel (%p333) target = $region28
        $region27: #{tpu_custom_call.1} parent=11 // pred_region
          _
        $region28: #{tpu_custom_call.1} parent=11 // pred_fallthru
          _
        // Predicated region
        $region29: #{tpu_custom_call.1} parent=11 // pred_check
          %p336 = pneg %p178
        $region30: #{tpu_custom_call.1} parent=11 // pred_check_branch
          %338 = sbr.rel (%p336) target = $region32
        $region31: #{tpu_custom_call.1} parent=11 // pred_region
          _
        $region32: #{tpu_custom_call.1} parent=11 // pred_fallthru
          _
        // Predicated region
        $region33: #{tpu_custom_call.1} parent=11 // pred_check
          %p339 = pneg %p199
        $region34: #{tpu_custom_call.1} parent=11 // pred_check_branch
          %341 = sbr.rel (%p339) target = $region36
        $region35: #{tpu_custom_call.1} parent=11 // pred_region
          _
        $region36: #{tpu_custom_call.1} parent=11 // pred_fallthru
          _
        // Predicated region
        $region37: #{tpu_custom_call.1} parent=11 // pred_check
          %p342 = pneg %p220
        $region38: #{tpu_custom_call.1} parent=11 // pred_check_branch
          %344 = sbr.rel (%p342) target = $region40
        $region39: #{tpu_custom_call.1} parent=11 // pred_region
          _
        $region40: #{tpu_custom_call.1} parent=11 // pred_fallthru
          _
        // Predicated region
        $region41: #{tpu_custom_call.1} parent=11 // pred_check
          %p345 = pneg %p241
        $region42: #{tpu_custom_call.1} parent=11 // pred_check_branch
          %347 = sbr.rel (%p345) target = $region44
        $region43: #{tpu_custom_call.1} parent=11 // pred_region
          _
        $region44: #{tpu_custom_call.1} parent=11 // pred_fallthru
          _
        // Predicated region
        $region45: #{tpu_custom_call.1} parent=11 // pred_check
          %p348 = pneg %p262
        $region46: #{tpu_custom_call.1} parent=11 // pred_check_branch
          %350 = sbr.rel (%p348) target = $region48
        $region47: #{tpu_custom_call.1} parent=11 // pred_region
          _
        $region48: #{tpu_custom_call.1} parent=11 // pred_fallthru
          _
        // Predicated region
        $region49: #{tpu_custom_call.1} parent=11 // pred_check
          %p351 = pneg %p283
        $region50: #{tpu_custom_call.1} parent=11 // pred_check_branch
          %353 = sbr.rel (%p351) target = $region52
        $region51: #{tpu_custom_call.1} parent=11 // pred_region
          _
        $region52: #{tpu_custom_call.1} parent=11 // pred_fallthru
          _
      $region12: #{tpu_custom_call.1} parent=5 // pred_fallthru
        _
      %p354 = scmp.lt.s32.totalorder %s21, 2
      // Predicated region
      $region53: #{tpu_custom_call.1} parent=5 // pred_check
        %p355 = pneg %p354
      $region54: #{tpu_custom_call.1} parent=5 // pred_check_branch
        %357 = sbr.rel (%p355) target = $region56
      $region55: #{tpu_custom_call.1} parent=5 // pred_region
        // Predicated region
        $region57: #{tpu_custom_call.1} parent=55 // pred_check
          %p358 = pneg %p41
        $region58: #{tpu_custom_call.1} parent=55 // pred_check_branch
          %360 = sbr.rel (%p358) target = $region60
        $region59: #{tpu_custom_call.1} parent=55 // pred_region
          %s361 = smul.u32 32, %s21
          %s362 = ssub.s32 38, %s361
          %p363 = scmp.lt.s32.totalorder %s362, 32
          %s364 = scalar_select %p363, %s362, 32
          %s365 = smul.u32 128, %s364
          %p366 = scmp.lt.s32.totalorder %s361, 37
          %s367 = scalar_select %p366, %s361, 37
          %s368 = smul.addr %s367, 8
          %s369 = scalar_lea.vmem %s0, %s368
          %s370 = smul.u32 32, %s21
          %s371 = ssub.s32 38, %s370
          %p372 = scmp.lt.s32.totalorder %s371, 32
          %s373 = scalar_select %p372, %s371, 32
          %s374 = smul.u32 128, %s373
        $region60: #{tpu_custom_call.1} parent=55 // pred_fallthru
          _
        // Predicated region
        $region61: #{tpu_custom_call.1} parent=55 // pred_check
          %p375 = pneg %p67
        $region62: #{tpu_custom_call.1} parent=55 // pred_check_branch
          %377 = sbr.rel (%p375) target = $region64
        $region63: #{tpu_custom_call.1} parent=55 // pred_region
          %s378 = smul.u32 32, %s21
          %s379 = ssub.s32 38, %s378
          %p380 = scmp.lt.s32.totalorder %s379, 32
          %s381 = scalar_select %p380, %s379, 32
          %s382 = smul.u32 128, %s381
          %p383 = scmp.lt.s32.totalorder %s378, 37
          %s384 = scalar_select %p383, %s378, 37
          %s385 = smul.addr %s384, 8
          %s386 = scalar_lea.vmem %s1, %s385
          %s387 = smul.u32 32, %s21
          %s388 = ssub.s32 38, %s387
          %p389 = scmp.lt.s32.totalorder %s388, 32
          %s390 = scalar_select %p389, %s388, 32
          %s391 = smul.u32 128, %s390
        $region64: #{tpu_custom_call.1} parent=55 // pred_fallthru
          _
      $region56: #{tpu_custom_call.1} parent=5 // pred_fallthru
        _
      %p392 = scmp.le.s32.totalorder 1, %s21
      %p393 = scmp.lt.s32.totalorder %s21, 3
      %p394 = pnand %p392, %p393
      %p395 = pneg %p394
      // Predicated region
      $region65: #{tpu_custom_call.1} parent=5 // pred_check
        _
      $region66: #{tpu_custom_call.1} parent=5 // pred_check_branch
        %397 = sbr.rel (%p394) target = $region68
      $region67: #{tpu_custom_call.1} parent=5 // pred_region
        %s398 = ssub.s32 %s21, 1
        %s399 = smul.u32 32, %s26
        %s400 = ssub.s32 38, %s399
        %p401 = scmp.lt.s32.totalorder %s400, 32
        %s402 = scalar_select %p401, %s400, 32
        %s403 = smul.u32 128, %s402
        %p404 = scmp.lt.s32.totalorder %s399, 37
        %s405 = scalar_select %p404, %s399, 37
        %s406 = smul.addr %s405, 8
        %s407 = scalar_lea.vmem %s0, %s406
        %p408 = pneg %p47
        %p409 = pneg %p44
        %s410 = smul.u32 32, %s26
        %s411 = ssub.s32 38, %s410
        %p412 = scmp.lt.s32.totalorder %s411, 32
        %s413 = scalar_select %p412, %s411, 32
        %s414 = smul.u32 128, %s413
        %p415 = scmp.lt.s32.totalorder %s410, 37
        %s416 = scalar_select %p415, %s410, 37
        %s417 = smul.addr %s416, 8
        %s418 = scalar_lea.vmem %s1, %s417
        %p419 = pneg %p73
        %p420 = pneg %p70
        %p421 = pneg %p94
        %p422 = pneg %p91
        %p423 = pneg %p115
        %p424 = pneg %p112
        %p425 = pneg %p136
        %p426 = pneg %p133
        %p427 = pneg %p157
        %p428 = pneg %p154
        %p429 = pneg %p178
        %p430 = pneg %p175
        %p431 = pneg %p199
        %p432 = pneg %p196
        %p433 = pneg %p220
        %p434 = pneg %p217
        %p435 = pneg %p241
        %p436 = pneg %p238
        %p437 = pneg %p262
        %p438 = pneg %p259
        %p439 = pneg %p283
        %p440 = pneg %p280
        %p441 = pneg %p309
        %p442 = pneg %p306
        %s443 = sand.u32 %s296, 1
        %s444 = scalar_lea.sflag [#allocation3], %s443
        %s445 = sand.u32 %s296, 1
        %s446 = smul.addr %s445, 2
        %s447 = scalar_lea.vmem [#allocation2], %s446
        %s448 = smul.u32 32, %s26
        %s449 = ssub.s32 38, %s448
        %p450 = scmp.lt.s32.totalorder %s449, 32
        %s451 = scalar_select %p450, %s449, 32
        %s452 = smul.u32 128, %s451
        %p453 = scmp.lt.s32.totalorder %s448, 37
        %s454 = scalar_select %p453, %s448, 37
        %s455 = smul.addr %s454, 8
        %s456 = scalar_lea.vmem %s0, %s455
        %s457 = smul.u32 32, %s26
        %s458 = ssub.s32 38, %s457
        %p459 = scmp.lt.s32.totalorder %s458, 32
        %s460 = scalar_select %p459, %s458, 32
        %s461 = smul.u32 128, %s460
        %s462 = smul.u32 32, %s26
        %s463 = ssub.s32 38, %s462
        %p464 = scmp.lt.s32.totalorder %s463, 32
        %s465 = scalar_select %p464, %s463, 32
        %s466 = smul.u32 128, %s465
        %p467 = scmp.lt.s32.totalorder %s462, 37
        %s468 = scalar_select %p467, %s462, 37
        %s469 = smul.addr %s468, 8
        %s470 = scalar_lea.vmem %s1, %s469
        %s471 = smul.u32 32, %s26
        %s472 = ssub.s32 38, %s471
        %p473 = scmp.lt.s32.totalorder %s472, 32
        %s474 = scalar_select %p473, %s472, 32
        %s475 = smul.u32 128, %s474
        %s476 = smul.u32 2, %s26
        %v477 = vld [vmem:[%s470] sm:$0xff]
        %v478 = vld [vmem:[%s470 + $0x8] sm:$0xff]
        %v479 = vld [vmem:[%s470 + $0x10] sm:$0xff]
        %v480 = vld [vmem:[%s470 + $0x18] sm:$0xff]
        %v481 = vld [vmem:[%s470 + $0x20] sm:$0xff]
        %v482 = vld [vmem:[%s470 + $0x28] sm:$0xff]
        %v483 = vld [vmem:[%s470 + $0x30] sm:$0xff]
        %v484 = vld [vmem:[%s470 + $0x38] sm:$0xff]
        %v485 = vld [vmem:[%s470 + $0x40] sm:$0xff]
        %v486 = vld [vmem:[%s470 + $0x48] sm:$0xff]
        %v487 = vld [vmem:[%s470 + $0x50] sm:$0xff]
        %v488 = vld [vmem:[%s470 + $0x58] sm:$0xff]
        %v489 = vld [vmem:[%s470 + $0x60] sm:$0xff]
        %v490 = vld [vmem:[%s470 + $0x68] sm:$0xff]
        %v491 = vld [vmem:[%s470 + $0x70] sm:$0xff]
        %v492 = vld [vmem:[%s470 + $0x78] sm:$0xff]
        %v493 = vld [vmem:[%s470 + $0x80] sm:$0xff]
        %v494 = vld [vmem:[%s470 + $0x88] sm:$0xff]
        %v495 = vld [vmem:[%s470 + $0x90] sm:$0xff]
        %v496 = vld [vmem:[%s470 + $0x98] sm:$0xff]
        %v497 = vld [vmem:[%s470 + $0xa0] sm:$0xff]
        %v498 = vld [vmem:[%s470 + $0xa8] sm:$0xff]
        %v499 = vld [vmem:[%s470 + $0xb0] sm:$0xff]
        %v500 = vld [vmem:[%s470 + $0xb8] sm:$0xff]
        %v501 = vld [vmem:[%s470 + $0xc0] sm:$0xff]
        %v502 = vld [vmem:[%s470 + $0xc8] sm:$0xff]
        %v503 = vld [vmem:[%s470 + $0xd0] sm:$0xff]
        %v504 = vld [vmem:[%s470 + $0xd8] sm:$0xff]
        %v505 = vld [vmem:[%s470 + $0xe0] sm:$0xff]
        %v506 = vld [vmem:[%s470 + $0xe8] sm:$0xff]
        %v507 = vld [vmem:[%s470 + $0xf0] sm:$0xff]
        %v508 = vld [vmem:[%s470 + $0xf8] sm:$0xff]
        %v509 = vld [vmem:[%s5] sm:$0x1]
        %v510 = vld [vmem:[%s4] sm:$0x1]
        %512 = vset.pattern.permute.xlu0 0
        %513 = vperm.xlu0 %512, %v477
        %v514 = vpop.permute.xlu0 %513
        %517 = vset.pattern.permute.xlu0 0
        %518 = vperm.xlu0 %517, %v478
        %v519 = vpop.permute.xlu0 %518
        %522 = vset.pattern.permute.xlu0 0
        %523 = vperm.xlu0 %522, %v479
        %v524 = vpop.permute.xlu0 %523
        %527 = vset.pattern.permute.xlu0 0
        %528 = vperm.xlu0 %527, %v480
        %v529 = vpop.permute.xlu0 %528
        %532 = vset.pattern.permute.xlu0 0
        %533 = vperm.xlu0 %532, %v481
        %v534 = vpop.permute.xlu0 %533
        %537 = vset.pattern.permute.xlu0 0
        %538 = vperm.xlu0 %537, %v482
        %v539 = vpop.permute.xlu0 %538
        %542 = vset.pattern.permute.xlu0 0
        %543 = vperm.xlu0 %542, %v483
        %v544 = vpop.permute.xlu0 %543
        %547 = vset.pattern.permute.xlu0 0
        %548 = vperm.xlu0 %547, %v484
        %v549 = vpop.permute.xlu0 %548
        %552 = vset.pattern.permute.xlu0 0
        %553 = vperm.xlu0 %552, %v485
        %v554 = vpop.permute.xlu0 %553
        %557 = vset.pattern.permute.xlu0 0
        %558 = vperm.xlu0 %557, %v486
        %v559 = vpop.permute.xlu0 %558
        %562 = vset.pattern.permute.xlu0 0
        %563 = vperm.xlu0 %562, %v487
        %v564 = vpop.permute.xlu0 %563
        %567 = vset.pattern.permute.xlu0 0
        %568 = vperm.xlu0 %567, %v488
        %v569 = vpop.permute.xlu0 %568
        %572 = vset.pattern.permute.xlu0 0
        %573 = vperm.xlu0 %572, %v489
        %v574 = vpop.permute.xlu0 %573
        %577 = vset.pattern.permute.xlu0 0
        %578 = vperm.xlu0 %577, %v490
        %v579 = vpop.permute.xlu0 %578
        %582 = vset.pattern.permute.xlu0 0
        %583 = vperm.xlu0 %582, %v491
        %v584 = vpop.permute.xlu0 %583
        %587 = vset.pattern.permute.xlu0 0
        %588 = vperm.xlu0 %587, %v492
        %v589 = vpop.permute.xlu0 %588
        %592 = vset.pattern.permute.xlu0 0
        %593 = vperm.xlu0 %592, %v493
        %v594 = vpop.permute.xlu0 %593
        %597 = vset.pattern.permute.xlu0 0
        %598 = vperm.xlu0 %597, %v494
        %v599 = vpop.permute.xlu0 %598
        %602 = vset.pattern.permute.xlu0 0
        %603 = vperm.xlu0 %602, %v495
        %v604 = vpop.permute.xlu0 %603
        %607 = vset.pattern.permute.xlu0 0
        %608 = vperm.xlu0 %607, %v496
        %v609 = vpop.permute.xlu0 %608
        %612 = vset.pattern.permute.xlu0 0
        %613 = vperm.xlu0 %612, %v497
        %v614 = vpop.permute.xlu0 %613
        %617 = vset.pattern.permute.xlu0 0
        %618 = vperm.xlu0 %617, %v498
        %v619 = vpop.permute.xlu0 %618
        %622 = vset.pattern.permute.xlu0 0
        %623 = vperm.xlu0 %622, %v499
        %v624 = vpop.permute.xlu0 %623
        %627 = vset.pattern.permute.xlu0 0
        %628 = vperm.xlu0 %627, %v500
        %v629 = vpop.permute.xlu0 %628
        %632 = vset.pattern.permute.xlu0 0
        %633 = vperm.xlu0 %632, %v501
        %v634 = vpop.permute.xlu0 %633
        %637 = vset.pattern.permute.xlu0 0
        %638 = vperm.xlu0 %637, %v502
        %v639 = vpop.permute.xlu0 %638
        %642 = vset.pattern.permute.xlu0 0
        %643 = vperm.xlu0 %642, %v503
        %v644 = vpop.permute.xlu0 %643
        %647 = vset.pattern.permute.xlu0 0
        %648 = vperm.xlu0 %647, %v504
        %v649 = vpop.permute.xlu0 %648
        %652 = vset.pattern.permute.xlu0 0
        %653 = vperm.xlu0 %652, %v505
        %v654 = vpop.permute.xlu0 %653
        %657 = vset.pattern.permute.xlu0 0
        %658 = vperm.xlu0 %657, %v506
        %v659 = vpop.permute.xlu0 %658
        %662 = vset.pattern.permute.xlu0 0
        %663 = vperm.xlu0 %662, %v507
        %v664 = vpop.permute.xlu0 %663
        %667 = vset.pattern.permute.xlu0 0
        %668 = vperm.xlu0 %667, %v508
        %v669 = vpop.permute.xlu0 %668
        %v671 = vlaneseq
        %v672 = vshrl.u32 %v671, 7
        %v673 = vsub.s32 0, %v672
        %v674 = vrot.slane %v510, %v673
        %v675 = vmul.f32 %v514, %v674
        %v676 = vmul.f32 %v519, %v674
        %v677 = vmul.f32 %v524, %v674
        %v678 = vmul.f32 %v529, %v674
        %v679 = vmul.f32 %v534, %v674
        %v680 = vmul.f32 %v539, %v674
        %v681 = vmul.f32 %v544, %v674
        %v682 = vmul.f32 %v549, %v674
        %v683 = vmul.f32 %v554, %v674
        %v684 = vmul.f32 %v559, %v674
        %v685 = vmul.f32 %v564, %v674
        %v686 = vmul.f32 %v569, %v674
        %v687 = vmul.f32 %v574, %v674
        %v688 = vmul.f32 %v579, %v674
        %v689 = vmul.f32 %v584, %v674
        %v690 = vmul.f32 %v589, %v674
        %v691 = vmul.f32 %v594, %v674
        %v692 = vmul.f32 %v599, %v674
        %v693 = vmul.f32 %v604, %v674
        %v694 = vmul.f32 %v609, %v674
        %v695 = vmul.f32 %v614, %v674
        %v696 = vmul.f32 %v619, %v674
        %v697 = vmul.f32 %v624, %v674
        %v698 = vmul.f32 %v629, %v674
        %v699 = vmul.f32 %v634, %v674
        %v700 = vmul.f32 %v639, %v674
        %v701 = vmul.f32 %v644, %v674
        %v702 = vmul.f32 %v649, %v674
        %v703 = vmul.f32 %v654, %v674
        %v704 = vmul.f32 %v659, %v674
        %v705 = vmul.f32 %v664, %v674
        %v706 = vmul.f32 %v669, %v674
        %v708 = vlaneseq
        %v709 = vshrl.u32 %v708, 7
        %v710 = vsub.s32 0, %v709
        %v711 = vrot.slane %v509, %v710
        %v713 = vadd.f32 %v711, %v675
        %v714 = vadd.f32 %v711, %v676
        %v715 = vadd.f32 %v711, %v677
        %v716 = vadd.f32 %v711, %v678
        %v717 = vadd.f32 %v711, %v679
        %v718 = vadd.f32 %v711, %v680
        %v719 = vadd.f32 %v711, %v681
        %v720 = vadd.f32 %v711, %v682
        %v721 = vadd.f32 %v711, %v683
        %v722 = vadd.f32 %v711, %v684
        %v723 = vadd.f32 %v711, %v685
        %v724 = vadd.f32 %v711, %v686
        %v725 = vadd.f32 %v711, %v687
        %v726 = vadd.f32 %v711, %v688
        %v727 = vadd.f32 %v711, %v689
        %v728 = vadd.f32 %v711, %v690
        %v729 = vadd.f32 %v711, %v691
        %v730 = vadd.f32 %v711, %v692
        %v731 = vadd.f32 %v711, %v693
        %v732 = vadd.f32 %v711, %v694
        %v733 = vadd.f32 %v711, %v695
        %v734 = vadd.f32 %v711, %v696
        %v735 = vadd.f32 %v711, %v697
        %v736 = vadd.f32 %v711, %v698
        %v737 = vadd.f32 %v711, %v699
        %v738 = vadd.f32 %v711, %v700
        %v739 = vadd.f32 %v711, %v701
        %v740 = vadd.f32 %v711, %v702
        %v741 = vadd.f32 %v711, %v703
        %v742 = vadd.f32 %v711, %v704
        %v743 = vadd.f32 %v711, %v705
        %v744 = vadd.f32 %v711, %v706
        %v745 = vld [vmem:[%s4 + $0x1] sm:$0x1]
        %746 = vset.pattern.permute.xlu0 1
        %747 = vperm.xlu0 %746, %v477
        %v748 = vpop.permute.xlu0 %747
        %750 = vset.pattern.permute.xlu0 1
        %751 = vperm.xlu0 %750, %v478
        %v752 = vpop.permute.xlu0 %751
        %754 = vset.pattern.permute.xlu0 1
        %755 = vperm.xlu0 %754, %v479
        %v756 = vpop.permute.xlu0 %755
        %758 = vset.pattern.permute.xlu0 1
        %759 = vperm.xlu0 %758, %v480
        %v760 = vpop.permute.xlu0 %759
        %762 = vset.pattern.permute.xlu0 1
        %763 = vperm.xlu0 %762, %v481
        %v764 = vpop.permute.xlu0 %763
        %766 = vset.pattern.permute.xlu0 1
        %767 = vperm.xlu0 %766, %v482
        %v768 = vpop.permute.xlu0 %767
        %770 = vset.pattern.permute.xlu0 1
        %771 = vperm.xlu0 %770, %v483
        %v772 = vpop.permute.xlu0 %771
        %774 = vset.pattern.permute.xlu0 1
        %775 = vperm.xlu0 %774, %v484
        %v776 = vpop.permute.xlu0 %775
        %778 = vset.pattern.permute.xlu0 1
        %779 = vperm.xlu0 %778, %v485
        %v780 = vpop.permute.xlu0 %779
        %782 = vset.pattern.permute.xlu0 1
        %783 = vperm.xlu0 %782, %v486
        %v784 = vpop.permute.xlu0 %783
        %786 = vset.pattern.permute.xlu0 1
        %787 = vperm.xlu0 %786, %v487
        %v788 = vpop.permute.xlu0 %787
        %790 = vset.pattern.permute.xlu0 1
        %791 = vperm.xlu0 %790, %v488
        %v792 = vpop.permute.xlu0 %791
        %794 = vset.pattern.permute.xlu0 1
        %795 = vperm.xlu0 %794, %v489
        %v796 = vpop.permute.xlu0 %795
        %798 = vset.pattern.permute.xlu0 1
        %799 = vperm.xlu0 %798, %v490
        %v800 = vpop.permute.xlu0 %799
        %802 = vset.pattern.permute.xlu0 1
        %803 = vperm.xlu0 %802, %v491
        %v804 = vpop.permute.xlu0 %803
        %806 = vset.pattern.permute.xlu0 1
        %807 = vperm.xlu0 %806, %v492
        %v808 = vpop.permute.xlu0 %807
        %810 = vset.pattern.permute.xlu0 1
        %811 = vperm.xlu0 %810, %v493
        %v812 = vpop.permute.xlu0 %811
        %814 = vset.pattern.permute.xlu0 1
        %815 = vperm.xlu0 %814, %v494
        %v816 = vpop.permute.xlu0 %815
        %818 = vset.pattern.permute.xlu0 1
        %819 = vperm.xlu0 %818, %v495
        %v820 = vpop.permute.xlu0 %819
        %822 = vset.pattern.permute.xlu0 1
        %823 = vperm.xlu0 %822, %v496
        %v824 = vpop.permute.xlu0 %823
        %826 = vset.pattern.permute.xlu0 1
        %827 = vperm.xlu0 %826, %v497
        %v828 = vpop.permute.xlu0 %827
        %830 = vset.pattern.permute.xlu0 1
        %831 = vperm.xlu0 %830, %v498
        %v832 = vpop.permute.xlu0 %831
        %834 = vset.pattern.permute.xlu0 1
        %835 = vperm.xlu0 %834, %v499
        %v836 = vpop.permute.xlu0 %835
        %838 = vset.pattern.permute.xlu0 1
        %839 = vperm.xlu0 %838, %v500
        %v840 = vpop.permute.xlu0 %839
        %842 = vset.pattern.permute.xlu0 1
        %843 = vperm.xlu0 %842, %v501
        %v844 = vpop.permute.xlu0 %843
        %846 = vset.pattern.permute.xlu0 1
        %847 = vperm.xlu0 %846, %v502
        %v848 = vpop.permute.xlu0 %847
        %850 = vset.pattern.permute.xlu0 1
        %851 = vperm.xlu0 %850, %v503
        %v852 = vpop.permute.xlu0 %851
        %854 = vset.pattern.permute.xlu0 1
        %855 = vperm.xlu0 %854, %v504
        %v856 = vpop.permute.xlu0 %855
        %858 = vset.pattern.permute.xlu0 1
        %859 = vperm.xlu0 %858, %v505
        %v860 = vpop.permute.xlu0 %859
        %862 = vset.pattern.permute.xlu0 1
        %863 = vperm.xlu0 %862, %v506
        %v864 = vpop.permute.xlu0 %863
        %866 = vset.pattern.permute.xlu0 1
        %867 = vperm.xlu0 %866, %v507
        %v868 = vpop.permute.xlu0 %867
        %870 = vset.pattern.permute.xlu0 1
        %871 = vperm.xlu0 %870, %v508
        %v872 = vpop.permute.xlu0 %871
        %v874 = vlaneseq
        %v875 = vshrl.u32 %v874, 7
        %v876 = vsub.s32 0, %v875
        %v877 = vrot.slane %v745, %v876
        %v878 = vmul.f32 %v748, %v877
        %v879 = vmul.f32 %v752, %v877
        %v880 = vmul.f32 %v756, %v877
        %v881 = vmul.f32 %v760, %v877
        %v882 = vmul.f32 %v764, %v877
        %v883 = vmul.f32 %v768, %v877
        %v884 = vmul.f32 %v772, %v877
        %v885 = vmul.f32 %v776, %v877
        %v886 = vmul.f32 %v780, %v877
        %v887 = vmul.f32 %v784, %v877
        %v888 = vmul.f32 %v788, %v877
        %v889 = vmul.f32 %v792, %v877
        %v890 = vmul.f32 %v796, %v877
        %v891 = vmul.f32 %v800, %v877
        %v892 = vmul.f32 %v804, %v877
        %v893 = vmul.f32 %v808, %v877
        %v894 = vmul.f32 %v812, %v877
        %v895 = vmul.f32 %v816, %v877
        %v896 = vmul.f32 %v820, %v877
        %v897 = vmul.f32 %v824, %v877
        %v898 = vmul.f32 %v828, %v877
        %v899 = vmul.f32 %v832, %v877
        %v900 = vmul.f32 %v836, %v877
        %v901 = vmul.f32 %v840, %v877
        %v902 = vmul.f32 %v844, %v877
        %v903 = vmul.f32 %v848, %v877
        %v904 = vmul.f32 %v852, %v877
        %v905 = vmul.f32 %v856, %v877
        %v906 = vmul.f32 %v860, %v877
        %v907 = vmul.f32 %v864, %v877
        %v908 = vmul.f32 %v868, %v877
        %v909 = vmul.f32 %v872, %v877
        %v910 = vadd.f32 %v713, %v878
        %v911 = vadd.f32 %v714, %v879
        %v912 = vadd.f32 %v715, %v880
        %v913 = vadd.f32 %v716, %v881
        %v914 = vadd.f32 %v717, %v882
        %v915 = vadd.f32 %v718, %v883
        %v916 = vadd.f32 %v719, %v884
        %v917 = vadd.f32 %v720, %v885
        %v918 = vadd.f32 %v721, %v886
        %v919 = vadd.f32 %v722, %v887
        %v920 = vadd.f32 %v723, %v888
        %v921 = vadd.f32 %v724, %v889
        %v922 = vadd.f32 %v725, %v890
        %v923 = vadd.f32 %v726, %v891
        %v924 = vadd.f32 %v727, %v892
        %v925 = vadd.f32 %v728, %v893
        %v926 = vadd.f32 %v729, %v894
        %v927 = vadd.f32 %v730, %v895
        %v928 = vadd.f32 %v731, %v896
        %v929 = vadd.f32 %v732, %v897
        %v930 = vadd.f32 %v733, %v898
        %v931 = vadd.f32 %v734, %v899
        %v932 = vadd.f32 %v735, %v900
        %v933 = vadd.f32 %v736, %v901
        %v934 = vadd.f32 %v737, %v902
        %v935 = vadd.f32 %v738, %v903
        %v936 = vadd.f32 %v739, %v904
        %v937 = vadd.f32 %v740, %v905
        %v938 = vadd.f32 %v741, %v906
        %v939 = vadd.f32 %v742, %v907
        %v940 = vadd.f32 %v743, %v908
        %v941 = vadd.f32 %v744, %v909
        %v942 = vtanh.pop %v910
        %v943 = vtanh.pop %v911
        %v944 = vtanh.pop %v912
        %v945 = vtanh.pop %v913
        %v946 = vtanh.pop %v914
        %v947 = vtanh.pop %v915
        %v948 = vtanh.pop %v916
        %v949 = vtanh.pop %v917
        %v950 = vtanh.pop %v918
        %v951 = vtanh.pop %v919
        %v952 = vtanh.pop %v920
        %v953 = vtanh.pop %v921
        %v954 = vtanh.pop %v922
        %v955 = vtanh.pop %v923
        %v956 = vtanh.pop %v924
        %v957 = vtanh.pop %v925
        %v958 = vtanh.pop %v926
        %v959 = vtanh.pop %v927
        %v960 = vtanh.pop %v928
        %v961 = vtanh.pop %v929
        %v962 = vtanh.pop %v930
        %v963 = vtanh.pop %v931
        %v964 = vtanh.pop %v932
        %v965 = vtanh.pop %v933
        %v966 = vtanh.pop %v934
        %v967 = vtanh.pop %v935
        %v968 = vtanh.pop %v936
        %v969 = vtanh.pop %v937
        %v970 = vtanh.pop %v938
        %v971 = vtanh.pop %v939
        %v972 = vtanh.pop %v940
        %v973 = vtanh.pop %v941
        %v974 = vld [vmem:[%s6] sm:$0xff]
        %v975 = vld [vmem:[%s6 + $0x8] sm:$0xff]
        %v976 = vld [vmem:[%s6 + $0x10] sm:$0xff]
        %v977 = vld [vmem:[%s6 + $0x18] sm:$0xff]
        %v978 = vld [vmem:[%s7] sm:$0x1]
        %v980 = vlaneseq
        %v981 = vshrl.u32 %v980, 7
        %v982 = vsub.s32 0, %v981
        %v983 = vrot.slane %v978, %v982
        %vm985 = vcmask 261120
        %v987 = vsel %vm985, %v942, 0
        %v990 = vsel %vm985, %v943, 0
        %v993 = vsel %vm985, %v944, 0
        %v996 = vsel %vm985, %v945, 0
        %v999 = vsel %vm985, %v946, 0
        %v1002 = vsel %vm985, %v947, 0
        %v1005 = vsel %vm985, %v948, 0
        %v1008 = vsel %vm985, %v949, 0
        %v1011 = vsel %vm985, %v950, 0
        %v1014 = vsel %vm985, %v951, 0
        %v1017 = vsel %vm985, %v952, 0
        %v1020 = vsel %vm985, %v953, 0
        %v1023 = vsel %vm985, %v954, 0
        %v1026 = vsel %vm985, %v955, 0
        %v1029 = vsel %vm985, %v956, 0
        %v1032 = vsel %vm985, %v957, 0
        %v1035 = vsel %vm985, %v958, 0
        %v1038 = vsel %vm985, %v959, 0
        %v1041 = vsel %vm985, %v960, 0
        %v1044 = vsel %vm985, %v961, 0
        %v1047 = vsel %vm985, %v962, 0
        %v1050 = vsel %vm985, %v963, 0
        %v1053 = vsel %vm985, %v964, 0
        %v1056 = vsel %vm985, %v965, 0
        %v1059 = vsel %vm985, %v966, 0
        %v1062 = vsel %vm985, %v967, 0
        %v1065 = vsel %vm985, %v968, 0
        %v1068 = vsel %vm985, %v969, 0
        %v1071 = vsel %vm985, %v970, 0
        %v1074 = vsel %vm985, %v971, 0
        %v1077 = vsel %vm985, %v972, 0
        %v1080 = vsel %vm985, %v973, 0
        %1082 = vmatprep.subr.mxu0 0.0
        %1083 = vmatpush1.msra.mxu0 %v974
        %1084 = vmatprep.subr.mxu0 0.0
        %1085 = vmatpush1.msra.mxu0 %v975
        %1086 = vmatprep.subr.mxu0 0.0
        %1087 = vmatpush1.msra.mxu0 %v976
        %1088 = vmatprep.subr.mxu0 0.0
        %1089 = vmatpush1.msra.mxu0 %v977
        %1090 = vmatprep.subr.mxu0 0.0
        %1091 = vmatpush1.msra.mxu0 0.0
        %1092 = vmatprep.subr.mxu0 0.0
        %1093 = vmatpush1.msra.mxu0 0.0
        %1094 = vmatprep.subr.mxu0 0.0
        %1095 = vmatpush1.msra.mxu0 0.0
        %1096 = vmatprep.subr.mxu0 0.0
        %1097 = vmatpush1.msra.mxu0 0.0
        %1098 = vmatprep.subr.mxu0 0.0
        %1099 = vmatpush1.msra.mxu0 0.0
        %1100 = vmatprep.subr.mxu0 0.0
        %1101 = vmatpush1.msra.mxu0 0.0
        %1102 = vmatprep.subr.mxu0 0.0
        %1103 = vmatpush1.msra.mxu0 0.0
        %1104 = vmatprep.subr.mxu0 0.0
        %1105 = vmatpush1.msra.mxu0 0.0
        %1106 = vmatprep.subr.mxu0 0.0
        %1107 = vmatpush1.msra.mxu0 0.0
        %1108 = vmatprep.subr.mxu0 0.0
        %1109 = vmatpush1.msra.mxu0 0.0
        %1110 = vmatprep.subr.mxu0 0.0
        %1111 = vmatpush1.msra.mxu0 0.0
        %1112 = vmatprep.subr.mxu0 0.0
        %1113 = vmatpush1.msra.mxu0 0.0
        %1114 = vmatprep.subr.mxu0 0.0
        %1115 = vmatpush1.msra.mxu0 0.0
        %1116 = vmatprep.subr.mxu0 0.0
        %1117 = vmatpush1.msra.mxu0 0.0
        %1118 = vmatprep.subr.mxu0 0.0
        %1119 = vmatpush1.msra.mxu0 0.0
        %1120 = vmatprep.subr.mxu0 0.0
        %1121 = vmatpush1.msra.mxu0 0.0
        %1122 = vmatprep.subr.mxu0 0.0
        %1123 = vmatpush1.msra.mxu0 0.0
        %1124 = vmatprep.subr.mxu0 0.0
        %1125 = vmatpush1.msra.mxu0 0.0
        %1126 = vmatprep.subr.mxu0 0.0
        %1127 = vmatpush1.msra.mxu0 0.0
        %1128 = vmatprep.subr.mxu0 0.0
        %1129 = vmatpush1.msra.mxu0 0.0
        %1130 = vmatprep.subr.mxu0 0.0
        %1131 = vmatpush1.msra.mxu0 0.0
        %1132 = vmatprep.subr.mxu0 0.0
        %1133 = vmatpush1.msra.mxu0 0.0
        %1134 = vmatprep.subr.mxu0 0.0
        %1135 = vmatpush1.msra.mxu0 0.0
        %1136 = vmatprep.subr.mxu0 0.0
        %1137 = vmatpush1.msra.mxu0 0.0
        %1138 = vmatprep.subr.mxu0 0.0
        %1139 = vmatpush1.msra.mxu0 0.0
        %1140 = vmatprep.subr.mxu0 0.0
        %1141 = vmatpush1.msra.mxu0 0.0
        %1142 = vmatprep.subr.mxu0 0.0
        %1143 = vmatpush1.msra.mxu0 0.0
        %1144 = vmatprep.subr.mxu0 0.0
        %1145 = vmatpush1.msra.mxu0 0.0
        %1146 = vmatprep.mubr.f32.mxu0 0.0
        %1147 = vmatmul.mubr.f32.gmra.mrb[0].mxu0 %v987
        %v1148 = vpop.f32.mrb[0].mxu0
        %v1149 = vadd.f32 %v983, %v1148
        %v1150 = vpop.f32.mrb[0].mxu0
        %1151 = vmatprep.mubr.f32.mxu0 0.0
        %1152 = vmatmul.mubr.f32.gmra.mrb[0].mxu0 %v990
        %v1153 = vpop.f32.mrb[0].mxu0
        %v1154 = vadd.f32 %v983, %v1153
        %v1155 = vpop.f32.mrb[0].mxu0
        %1156 = vmatprep.mubr.f32.mxu0 0.0
        %1157 = vmatmul.mubr.f32.gmra.mrb[0].mxu0 %v993
        %v1158 = vpop.f32.mrb[0].mxu0
        %v1159 = vadd.f32 %v983, %v1158
        %v1160 = vpop.f32.mrb[0].mxu0
        %1161 = vmatprep.mubr.f32.mxu0 0.0
        %1162 = vmatmul.mubr.f32.gmra.mrb[0].mxu0 %v996
        %v1163 = vpop.f32.mrb[0].mxu0
        %v1164 = vadd.f32 %v983, %v1163
        %v1165 = vpop.f32.mrb[0].mxu0
        %1166 = vmatprep.mubr.f32.mxu0 0.0
        %1167 = vmatmul.mubr.f32.gmra.mrb[0].mxu0 %v999
        %v1168 = vpop.f32.mrb[0].mxu0
        %v1169 = vadd.f32 %v983, %v1168
        %v1170 = vpop.f32.mrb[0].mxu0
        %1171 = vmatprep.mubr.f32.mxu0 0.0
        %1172 = vmatmul.mubr.f32.gmra.mrb[0].mxu0 %v1002
        %v1173 = vpop.f32.mrb[0].mxu0
        %v1174 = vadd.f32 %v983, %v1173
        %v1175 = vpop.f32.mrb[0].mxu0
        %1176 = vmatprep.mubr.f32.mxu0 0.0
        %1177 = vmatmul.mubr.f32.gmra.mrb[0].mxu0 %v1005
        %v1178 = vpop.f32.mrb[0].mxu0
        %v1179 = vadd.f32 %v983, %v1178
        %v1180 = vpop.f32.mrb[0].mxu0
        %1181 = vmatprep.mubr.f32.mxu0 0.0
        %1182 = vmatmul.mubr.f32.gmra.mrb[0].mxu0 %v1008
        %v1183 = vpop.f32.mrb[0].mxu0
        %v1184 = vadd.f32 %v983, %v1183
        %v1185 = vpop.f32.mrb[0].mxu0
        %1186 = vmatprep.mubr.f32.mxu0 0.0
        %1187 = vmatmul.mubr.f32.gmra.mrb[0].mxu0 %v1011
        %v1188 = vpop.f32.mrb[0].mxu0
        %v1189 = vadd.f32 %v983, %v1188
        %v1190 = vpop.f32.mrb[0].mxu0
        %1191 = vmatprep.mubr.f32.mxu0 0.0
        %1192 = vmatmul.mubr.f32.gmra.mrb[0].mxu0 %v1014
        %v1193 = vpop.f32.mrb[0].mxu0
        %v1194 = vadd.f32 %v983, %v1193
        %v1195 = vpop.f32.mrb[0].mxu0
        %1196 = vmatprep.mubr.f32.mxu0 0.0
        %1197 = vmatmul.mubr.f32.gmra.mrb[0].mxu0 %v1017
        %v1198 = vpop.f32.mrb[0].mxu0
        %v1199 = vadd.f32 %v983, %v1198
        %v1200 = vpop.f32.mrb[0].mxu0
        %1201 = vmatprep.mubr.f32.mxu0 0.0
        %1202 = vmatmul.mubr.f32.gmra.mrb[0].mxu0 %v1020
        %v1203 = vpop.f32.mrb[0].mxu0
        %v1204 = vadd.f32 %v983, %v1203
        %v1205 = vpop.f32.mrb[0].mxu0
        %1206 = vmatprep.mubr.f32.mxu0 0.0
        %1207 = vmatmul.mubr.f32.gmra.mrb[0].mxu0 %v1023
        %v1208 = vpop.f32.mrb[0].mxu0
        %v1209 = vadd.f32 %v983, %v1208
        %v1210 = vpop.f32.mrb[0].mxu0
        %1211 = vmatprep.mubr.f32.mxu0 0.0
        %1212 = vmatmul.mubr.f32.gmra.mrb[0].mxu0 %v1026
        %v1213 = vpop.f32.mrb[0].mxu0
        %v1214 = vadd.f32 %v983, %v1213
        %v1215 = vpop.f32.mrb[0].mxu0
        %1216 = vmatprep.mubr.f32.mxu0 0.0
        %1217 = vmatmul.mubr.f32.gmra.mrb[0].mxu0 %v1029
        %v1218 = vpop.f32.mrb[0].mxu0
        %v1219 = vadd.f32 %v983, %v1218
        %v1220 = vpop.f32.mrb[0].mxu0
        %1221 = vmatprep.mubr.f32.mxu0 0.0
        %1222 = vmatmul.mubr.f32.gmra.mrb[0].mxu0 %v1032
        %v1223 = vpop.f32.mrb[0].mxu0
        %v1224 = vadd.f32 %v983, %v1223
        %v1225 = vpop.f32.mrb[0].mxu0
        %1226 = vmatprep.mubr.f32.mxu0 0.0
        %1227 = vmatmul.mubr.f32.gmra.mrb[0].mxu0 %v1035
        %v1228 = vpop.f32.mrb[0].mxu0
        %v1229 = vadd.f32 %v983, %v1228
        %v1230 = vpop.f32.mrb[0].mxu0
        %1231 = vmatprep.mubr.f32.mxu0 0.0
        %1232 = vmatmul.mubr.f32.gmra.mrb[0].mxu0 %v1038
        %v1233 = vpop.f32.mrb[0].mxu0
        %v1234 = vadd.f32 %v983, %v1233
        %v1235 = vpop.f32.mrb[0].mxu0
        %1236 = vmatprep.mubr.f32.mxu0 0.0
        %1237 = vmatmul.mubr.f32.gmra.mrb[0].mxu0 %v1041
        %v1238 = vpop.f32.mrb[0].mxu0
        %v1239 = vadd.f32 %v983, %v1238
        %v1240 = vpop.f32.mrb[0].mxu0
        %1241 = vmatprep.mubr.f32.mxu0 0.0
        %1242 = vmatmul.mubr.f32.gmra.mrb[0].mxu0 %v1044
        %v1243 = vpop.f32.mrb[0].mxu0
        %v1244 = vadd.f32 %v983, %v1243
        %v1245 = vpop.f32.mrb[0].mxu0
        %1246 = vmatprep.mubr.f32.mxu0 0.0
        %1247 = vmatmul.mubr.f32.gmra.mrb[0].mxu0 %v1047
        %v1248 = vpop.f32.mrb[0].mxu0
        %v1249 = vadd.f32 %v983, %v1248
        %v1250 = vpop.f32.mrb[0].mxu0
        %1251 = vmatprep.mubr.f32.mxu0 0.0
        %1252 = vmatmul.mubr.f32.gmra.mrb[0].mxu0 %v1050
        %v1253 = vpop.f32.mrb[0].mxu0
        %v1254 = vadd.f32 %v983, %v1253
        %v1255 = vpop.f32.mrb[0].mxu0
        %1256 = vmatprep.mubr.f32.mxu0 0.0
        %1257 = vmatmul.mubr.f32.gmra.mrb[0].mxu0 %v1053
        %v1258 = vpop.f32.mrb[0].mxu0
        %v1259 = vadd.f32 %v983, %v1258
        %v1260 = vpop.f32.mrb[0].mxu0
        %1261 = vmatprep.mubr.f32.mxu0 0.0
        %1262 = vmatmul.mubr.f32.gmra.mrb[0].mxu0 %v1056
        %v1263 = vpop.f32.mrb[0].mxu0
        %v1264 = vadd.f32 %v983, %v1263
        %v1265 = vpop.f32.mrb[0].mxu0
        %1266 = vmatprep.mubr.f32.mxu0 0.0
        %1267 = vmatmul.mubr.f32.gmra.mrb[0].mxu0 %v1059
        %v1268 = vpop.f32.mrb[0].mxu0
        %v1269 = vadd.f32 %v983, %v1268
        %v1270 = vpop.f32.mrb[0].mxu0
        %1271 = vmatprep.mubr.f32.mxu0 0.0
        %1272 = vmatmul.mubr.f32.gmra.mrb[0].mxu0 %v1062
        %v1273 = vpop.f32.mrb[0].mxu0
        %v1274 = vadd.f32 %v983, %v1273
        %v1275 = vpop.f32.mrb[0].mxu0
        %1276 = vmatprep.mubr.f32.mxu0 0.0
        %1277 = vmatmul.mubr.f32.gmra.mrb[0].mxu0 %v1065
        %v1278 = vpop.f32.mrb[0].mxu0
        %v1279 = vadd.f32 %v983, %v1278
        %v1280 = vpop.f32.mrb[0].mxu0
        %1281 = vmatprep.mubr.f32.mxu0 0.0
        %1282 = vmatmul.mubr.f32.gmra.mrb[0].mxu0 %v1068
        %v1283 = vpop.f32.mrb[0].mxu0
        %v1284 = vadd.f32 %v983, %v1283
        %v1285 = vpop.f32.mrb[0].mxu0
        %1286 = vmatprep.mubr.f32.mxu0 0.0
        %1287 = vmatmul.mubr.f32.gmra.mrb[0].mxu0 %v1071
        %v1288 = vpop.f32.mrb[0].mxu0
        %v1289 = vadd.f32 %v983, %v1288
        %v1290 = vpop.f32.mrb[0].mxu0
        %1291 = vmatprep.mubr.f32.mxu0 0.0
        %1292 = vmatmul.mubr.f32.gmra.mrb[0].mxu0 %v1074
        %v1293 = vpop.f32.mrb[0].mxu0
        %v1294 = vadd.f32 %v983, %v1293
        %v1295 = vpop.f32.mrb[0].mxu0
        %1296 = vmatprep.mubr.f32.mxu0 0.0
        %1297 = vmatmul.mubr.f32.gmra.mrb[0].mxu0 %v1077
        %v1298 = vpop.f32.mrb[0].mxu0
        %v1299 = vadd.f32 %v983, %v1298
        %v1300 = vpop.f32.mrb[0].mxu0
        %1301 = vmatprep.mubr.f32.mxu0 0.0
        %1302 = vmatmul.mubr.f32.gmra.mrb[0].mxu0 %v1080
        %v1303 = vpop.f32.mrb[0].mxu0
        %v1304 = vadd.f32 %v983, %v1303
        %v1305 = vpop.f32.mrb[0].mxu0
        %1306 = vdwg.mxu0
        %v1307 = vtanh.pop %v1149
        %v1308 = vtanh.pop %v1154
        %v1309 = vtanh.pop %v1159
        %v1310 = vtanh.pop %v1164
        %v1311 = vtanh.pop %v1169
        %v1312 = vtanh.pop %v1174
        %v1313 = vtanh.pop %v1179
        %v1314 = vtanh.pop %v1184
        %v1315 = vtanh.pop %v1189
        %v1316 = vtanh.pop %v1194
        %v1317 = vtanh.pop %v1199
        %v1318 = vtanh.pop %v1204
        %v1319 = vtanh.pop %v1209
        %v1320 = vtanh.pop %v1214
        %v1321 = vtanh.pop %v1219
        %v1322 = vtanh.pop %v1224
        %v1323 = vtanh.pop %v1229
        %v1324 = vtanh.pop %v1234
        %v1325 = vtanh.pop %v1239
        %v1326 = vtanh.pop %v1244
        %v1327 = vtanh.pop %v1249
        %v1328 = vtanh.pop %v1254
        %v1329 = vtanh.pop %v1259
        %v1330 = vtanh.pop %v1264
        %v1331 = vtanh.pop %v1269
        %v1332 = vtanh.pop %v1274
        %v1333 = vtanh.pop %v1279
        %v1334 = vtanh.pop %v1284
        %v1335 = vtanh.pop %v1289
        %v1336 = vtanh.pop %v1294
        %v1337 = vtanh.pop %v1299
        %v1338 = vtanh.pop %v1304
        %v1339 = vld [vmem:[%s8] sm:$0xff]
        %v1340 = vld [vmem:[%s8 + $0x8] sm:$0xff]
        %v1341 = vld [vmem:[%s8 + $0x10] sm:$0xff]
        %v1342 = vld [vmem:[%s8 + $0x18] sm:$0xff]
        %v1343 = vld [vmem:[%s9] sm:$0x1]
        %v1345 = vlaneseq
        %v1346 = vshrl.u32 %v1345, 7
        %v1347 = vsub.s32 0, %v1346
        %v1348 = vrot.slane %v1343, %v1347
        %v1351 = vsel %vm985, %v1307, 0
        %v1354 = vsel %vm985, %v1308, 0
        %v1357 = vsel %vm985, %v1309, 0
        %v1360 = vsel %vm985, %v1310, 0
        %v1363 = vsel %vm985, %v1311, 0
        %v1366 = vsel %vm985, %v1312, 0
        %v1369 = vsel %vm985, %v1313, 0
        %v1372 = vsel %vm985, %v1314, 0
        %v1375 = vsel %vm985, %v1315, 0
        %v1378 = vsel %vm985, %v1316, 0
        %v1381 = vsel %vm985, %v1317, 0
        %v1384 = vsel %vm985, %v1318, 0
        %v1387 = vsel %vm985, %v1319, 0
        %v1390 = vsel %vm985, %v1320, 0
        %v1393 = vsel %vm985, %v1321, 0
        %v1396 = vsel %vm985, %v1322, 0
        %v1399 = vsel %vm985, %v1323, 0
        %v1402 = vsel %vm985, %v1324, 0
        %v1405 = vsel %vm985, %v1325, 0
        %v1408 = vsel %vm985, %v1326, 0
        %v1411 = vsel %vm985, %v1327, 0
        %v1414 = vsel %vm985, %v1328, 0
        %v1417 = vsel %vm985, %v1329, 0
        %v1420 = vsel %vm985, %v1330, 0
        %v1423 = vsel %vm985, %v1331, 0
        %v1426 = vsel %vm985, %v1332, 0
        %v1429 = vsel %vm985, %v1333, 0
        %v1432 = vsel %vm985, %v1334, 0
        %v1435 = vsel %vm985, %v1335, 0
        %v1438 = vsel %vm985, %v1336, 0
        %v1441 = vsel %vm985, %v1337, 0
        %v1444 = vsel %vm985, %v1338, 0
        %1446 = vmatprep.subr.mxu0 0.0
        %1447 = vmatpush1.msra.mxu0 %v1339
        %1448 = vmatprep.subr.mxu0 0.0
        %1449 = vmatpush1.msra.mxu0 %v1340
        %1450 = vmatprep.subr.mxu0 0.0
        %1451 = vmatpush1.msra.mxu0 %v1341
        %1452 = vmatprep.subr.mxu0 0.0
        %1453 = vmatpush1.msra.mxu0 %v1342
        %1454 = vmatprep.subr.mxu0 0.0
        %1455 = vmatpush1.msra.mxu0 0.0
        %1456 = vmatprep.subr.mxu0 0.0
        %1457 = vmatpush1.msra.mxu0 0.0
        %1458 = vmatprep.subr.mxu0 0.0
        %1459 = vmatpush1.msra.mxu0 0.0
        %1460 = vmatprep.subr.mxu0 0.0
        %1461 = vmatpush1.msra.mxu0 0.0
        %1462 = vmatprep.subr.mxu0 0.0
        %1463 = vmatpush1.msra.mxu0 0.0
        %1464 = vmatprep.subr.mxu0 0.0
        %1465 = vmatpush1.msra.mxu0 0.0
        %1466 = vmatprep.subr.mxu0 0.0
        %1467 = vmatpush1.msra.mxu0 0.0
        %1468 = vmatprep.subr.mxu0 0.0
        %1469 = vmatpush1.msra.mxu0 0.0
        %1470 = vmatprep.subr.mxu0 0.0
        %1471 = vmatpush1.msra.mxu0 0.0
        %1472 = vmatprep.subr.mxu0 0.0
        %1473 = vmatpush1.msra.mxu0 0.0
        %1474 = vmatprep.subr.mxu0 0.0
        %1475 = vmatpush1.msra.mxu0 0.0
        %1476 = vmatprep.subr.mxu0 0.0
        %1477 = vmatpush1.msra.mxu0 0.0
        %1478 = vmatprep.subr.mxu0 0.0
        %1479 = vmatpush1.msra.mxu0 0.0
        %1480 = vmatprep.subr.mxu0 0.0
        %1481 = vmatpush1.msra.mxu0 0.0
        %1482 = vmatprep.subr.mxu0 0.0
        %1483 = vmatpush1.msra.mxu0 0.0
        %1484 = vmatprep.subr.mxu0 0.0
        %1485 = vmatpush1.msra.mxu0 0.0
        %1486 = vmatprep.subr.mxu0 0.0
        %1487 = vmatpush1.msra.mxu0 0.0
        %1488 = vmatprep.subr.mxu0 0.0
        %1489 = vmatpush1.msra.mxu0 0.0
        %1490 = vmatprep.subr.mxu0 0.0
        %1491 = vmatpush1.msra.mxu0 0.0
        %1492 = vmatprep.subr.mxu0 0.0
        %1493 = vmatpush1.msra.mxu0 0.0
        %1494 = vmatprep.subr.mxu0 0.0
        %1495 = vmatpush1.msra.mxu0 0.0
        %1496 = vmatprep.subr.mxu0 0.0
        %1497 = vmatpush1.msra.mxu0 0.0
        %1498 = vmatprep.subr.mxu0 0.0
        %1499 = vmatpush1.msra.mxu0 0.0
        %1500 = vmatprep.subr.mxu0 0.0
        %1501 = vmatpush1.msra.mxu0 0.0
        %1502 = vmatprep.subr.mxu0 0.0
        %1503 = vmatpush1.msra.mxu0 0.0
        %1504 = vmatprep.subr.mxu0 0.0
        %1505 = vmatpush1.msra.mxu0 0.0
        %1506 = vmatprep.subr.mxu0 0.0
        %1507 = vmatpush1.msra.mxu0 0.0
        %1508 = vmatprep.subr.mxu0 0.0
        %1509 = vmatpush1.msra.mxu0 0.0
        %1510 = vmatprep.mubr.f32.mxu0 0.0
        %1511 = vmatmul.mubr.f32.gmra.mrb[0].mxu0 %v1351
        %v1512 = vpop.f32.mrb[0].mxu0
        %v1513 = vadd.f32 %v1348, %v1512
        %v1514 = vpop.f32.mrb[0].mxu0
        %1515 = vmatprep.mubr.f32.mxu0 0.0
        %1516 = vmatmul.mubr.f32.gmra.mrb[0].mxu0 %v1354
        %v1517 = vpop.f32.mrb[0].mxu0
        %v1518 = vadd.f32 %v1348, %v1517
        %v1519 = vpop.f32.mrb[0].mxu0
        %1520 = vmatprep.mubr.f32.mxu0 0.0
        %1521 = vmatmul.mubr.f32.gmra.mrb[0].mxu0 %v1357
        %v1522 = vpop.f32.mrb[0].mxu0
        %v1523 = vadd.f32 %v1348, %v1522
        %v1524 = vpop.f32.mrb[0].mxu0
        %1525 = vmatprep.mubr.f32.mxu0 0.0
        %1526 = vmatmul.mubr.f32.gmra.mrb[0].mxu0 %v1360
        %v1527 = vpop.f32.mrb[0].mxu0
        %v1528 = vadd.f32 %v1348, %v1527
        %v1529 = vpop.f32.mrb[0].mxu0
        %1530 = vmatprep.mubr.f32.mxu0 0.0
        %1531 = vmatmul.mubr.f32.gmra.mrb[0].mxu0 %v1363
        %v1532 = vpop.f32.mrb[0].mxu0
        %v1533 = vadd.f32 %v1348, %v1532
        %v1534 = vpop.f32.mrb[0].mxu0
        %1535 = vmatprep.mubr.f32.mxu0 0.0
        %1536 = vmatmul.mubr.f32.gmra.mrb[0].mxu0 %v1366
        %v1537 = vpop.f32.mrb[0].mxu0
        %v1538 = vadd.f32 %v1348, %v1537
        %v1539 = vpop.f32.mrb[0].mxu0
        %1540 = vmatprep.mubr.f32.mxu0 0.0
        %1541 = vmatmul.mubr.f32.gmra.mrb[0].mxu0 %v1369
        %v1542 = vpop.f32.mrb[0].mxu0
        %v1543 = vadd.f32 %v1348, %v1542
        %v1544 = vpop.f32.mrb[0].mxu0
        %1545 = vmatprep.mubr.f32.mxu0 0.0
        %1546 = vmatmul.mubr.f32.gmra.mrb[0].mxu0 %v1372
        %v1547 = vpop.f32.mrb[0].mxu0
        %v1548 = vadd.f32 %v1348, %v1547
        %v1549 = vpop.f32.mrb[0].mxu0
        %1550 = vmatprep.mubr.f32.mxu0 0.0
        %1551 = vmatmul.mubr.f32.gmra.mrb[0].mxu0 %v1375
        %v1552 = vpop.f32.mrb[0].mxu0
        %v1553 = vadd.f32 %v1348, %v1552
        %v1554 = vpop.f32.mrb[0].mxu0
        %1555 = vmatprep.mubr.f32.mxu0 0.0
        %1556 = vmatmul.mubr.f32.gmra.mrb[0].mxu0 %v1378
        %v1557 = vpop.f32.mrb[0].mxu0
        %v1558 = vadd.f32 %v1348, %v1557
        %v1559 = vpop.f32.mrb[0].mxu0
        %1560 = vmatprep.mubr.f32.mxu0 0.0
        %1561 = vmatmul.mubr.f32.gmra.mrb[0].mxu0 %v1381
        %v1562 = vpop.f32.mrb[0].mxu0
        %v1563 = vadd.f32 %v1348, %v1562
        %v1564 = vpop.f32.mrb[0].mxu0
        %1565 = vmatprep.mubr.f32.mxu0 0.0
        %1566 = vmatmul.mubr.f32.gmra.mrb[0].mxu0 %v1384
        %v1567 = vpop.f32.mrb[0].mxu0
        %v1568 = vadd.f32 %v1348, %v1567
        %v1569 = vpop.f32.mrb[0].mxu0
        %1570 = vmatprep.mubr.f32.mxu0 0.0
        %1571 = vmatmul.mubr.f32.gmra.mrb[0].mxu0 %v1387
        %v1572 = vpop.f32.mrb[0].mxu0
        %v1573 = vadd.f32 %v1348, %v1572
        %v1574 = vpop.f32.mrb[0].mxu0
        %1575 = vmatprep.mubr.f32.mxu0 0.0
        %1576 = vmatmul.mubr.f32.gmra.mrb[0].mxu0 %v1390
        %v1577 = vpop.f32.mrb[0].mxu0
        %v1578 = vadd.f32 %v1348, %v1577
        %v1579 = vpop.f32.mrb[0].mxu0
        %1580 = vmatprep.mubr.f32.mxu0 0.0
        %1581 = vmatmul.mubr.f32.gmra.mrb[0].mxu0 %v1393
        %v1582 = vpop.f32.mrb[0].mxu0
        %v1583 = vadd.f32 %v1348, %v1582
        %v1584 = vpop.f32.mrb[0].mxu0
        %1585 = vmatprep.mubr.f32.mxu0 0.0
        %1586 = vmatmul.mubr.f32.gmra.mrb[0].mxu0 %v1396
        %v1587 = vpop.f32.mrb[0].mxu0
        %v1588 = vadd.f32 %v1348, %v1587
        %v1589 = vpop.f32.mrb[0].mxu0
        %1590 = vmatprep.mubr.f32.mxu0 0.0
        %1591 = vmatmul.mubr.f32.gmra.mrb[0].mxu0 %v1399
        %v1592 = vpop.f32.mrb[0].mxu0
        %v1593 = vadd.f32 %v1348, %v1592
        %v1594 = vpop.f32.mrb[0].mxu0
        %1595 = vmatprep.mubr.f32.mxu0 0.0
        %1596 = vmatmul.mubr.f32.gmra.mrb[0].mxu0 %v1402
        %v1597 = vpop.f32.mrb[0].mxu0
        %v1598 = vadd.f32 %v1348, %v1597
        %v1599 = vpop.f32.mrb[0].mxu0
        %1600 = vmatprep.mubr.f32.mxu0 0.0
        %1601 = vmatmul.mubr.f32.gmra.mrb[0].mxu0 %v1405
        %v1602 = vpop.f32.mrb[0].mxu0
        %v1603 = vadd.f32 %v1348, %v1602
        %v1604 = vpop.f32.mrb[0].mxu0
        %1605 = vmatprep.mubr.f32.mxu0 0.0
        %1606 = vmatmul.mubr.f32.gmra.mrb[0].mxu0 %v1408
        %v1607 = vpop.f32.mrb[0].mxu0
        %v1608 = vadd.f32 %v1348, %v1607
        %v1609 = vpop.f32.mrb[0].mxu0
        %1610 = vmatprep.mubr.f32.mxu0 0.0
        %1611 = vmatmul.mubr.f32.gmra.mrb[0].mxu0 %v1411
        %v1612 = vpop.f32.mrb[0].mxu0
        %v1613 = vadd.f32 %v1348, %v1612
        %v1614 = vpop.f32.mrb[0].mxu0
        %1615 = vmatprep.mubr.f32.mxu0 0.0
        %1616 = vmatmul.mubr.f32.gmra.mrb[0].mxu0 %v1414
        %v1617 = vpop.f32.mrb[0].mxu0
        %v1618 = vadd.f32 %v1348, %v1617
        %v1619 = vpop.f32.mrb[0].mxu0
        %1620 = vmatprep.mubr.f32.mxu0 0.0
        %1621 = vmatmul.mubr.f32.gmra.mrb[0].mxu0 %v1417
        %v1622 = vpop.f32.mrb[0].mxu0
        %v1623 = vadd.f32 %v1348, %v1622
        %v1624 = vpop.f32.mrb[0].mxu0
        %1625 = vmatprep.mubr.f32.mxu0 0.0
        %1626 = vmatmul.mubr.f32.gmra.mrb[0].mxu0 %v1420
        %v1627 = vpop.f32.mrb[0].mxu0
        %v1628 = vadd.f32 %v1348, %v1627
        %v1629 = vpop.f32.mrb[0].mxu0
        %1630 = vmatprep.mubr.f32.mxu0 0.0
        %1631 = vmatmul.mubr.f32.gmra.mrb[0].mxu0 %v1423
        %v1632 = vpop.f32.mrb[0].mxu0
        %v1633 = vadd.f32 %v1348, %v1632
        %v1634 = vpop.f32.mrb[0].mxu0
        %1635 = vmatprep.mubr.f32.mxu0 0.0
        %1636 = vmatmul.mubr.f32.gmra.mrb[0].mxu0 %v1426
        %v1637 = vpop.f32.mrb[0].mxu0
        %v1638 = vadd.f32 %v1348, %v1637
        %v1639 = vpop.f32.mrb[0].mxu0
        %1640 = vmatprep.mubr.f32.mxu0 0.0
        %1641 = vmatmul.mubr.f32.gmra.mrb[0].mxu0 %v1429
        %v1642 = vpop.f32.mrb[0].mxu0
        %v1643 = vadd.f32 %v1348, %v1642
        %v1644 = vpop.f32.mrb[0].mxu0
        %1645 = vmatprep.mubr.f32.mxu0 0.0
        %1646 = vmatmul.mubr.f32.gmra.mrb[0].mxu0 %v1432
        %v1647 = vpop.f32.mrb[0].mxu0
        %v1648 = vadd.f32 %v1348, %v1647
        %v1649 = vpop.f32.mrb[0].mxu0
        %1650 = vmatprep.mubr.f32.mxu0 0.0
        %1651 = vmatmul.mubr.f32.gmra.mrb[0].mxu0 %v1435
        %v1652 = vpop.f32.mrb[0].mxu0
        %v1653 = vadd.f32 %v1348, %v1652
        %v1654 = vpop.f32.mrb[0].mxu0
        %1655 = vmatprep.mubr.f32.mxu0 0.0
        %1656 = vmatmul.mubr.f32.gmra.mrb[0].mxu0 %v1438
        %v1657 = vpop.f32.mrb[0].mxu0
        %v1658 = vadd.f32 %v1348, %v1657
        %v1659 = vpop.f32.mrb[0].mxu0
        %1660 = vmatprep.mubr.f32.mxu0 0.0
        %1661 = vmatmul.mubr.f32.gmra.mrb[0].mxu0 %v1441
        %v1662 = vpop.f32.mrb[0].mxu0
        %v1663 = vadd.f32 %v1348, %v1662
        %v1664 = vpop.f32.mrb[0].mxu0
        %1665 = vmatprep.mubr.f32.mxu0 0.0
        %1666 = vmatmul.mubr.f32.gmra.mrb[0].mxu0 %v1444
        %v1667 = vpop.f32.mrb[0].mxu0
        %v1668 = vadd.f32 %v1348, %v1667
        %v1669 = vpop.f32.mrb[0].mxu0
        %1670 = vdwg.mxu0
        %v1671 = vtanh.pop %v1513
        %v1672 = vtanh.pop %v1518
        %v1673 = vtanh.pop %v1523
        %v1674 = vtanh.pop %v1528
        %v1675 = vtanh.pop %v1533
        %v1676 = vtanh.pop %v1538
        %v1677 = vtanh.pop %v1543
        %v1678 = vtanh.pop %v1548
        %v1679 = vtanh.pop %v1553
        %v1680 = vtanh.pop %v1558
        %v1681 = vtanh.pop %v1563
        %v1682 = vtanh.pop %v1568
        %v1683 = vtanh.pop %v1573
        %v1684 = vtanh.pop %v1578
        %v1685 = vtanh.pop %v1583
        %v1686 = vtanh.pop %v1588
        %v1687 = vtanh.pop %v1593
        %v1688 = vtanh.pop %v1598
        %v1689 = vtanh.pop %v1603
        %v1690 = vtanh.pop %v1608
        %v1691 = vtanh.pop %v1613
        %v1692 = vtanh.pop %v1618
        %v1693 = vtanh.pop %v1623
        %v1694 = vtanh.pop %v1628
        %v1695 = vtanh.pop %v1633
        %v1696 = vtanh.pop %v1638
        %v1697 = vtanh.pop %v1643
        %v1698 = vtanh.pop %v1648
        %v1699 = vtanh.pop %v1653
        %v1700 = vtanh.pop %v1658
        %v1701 = vtanh.pop %v1663
        %v1702 = vtanh.pop %v1668
        %v1703 = vld [vmem:[%s10] sm:$0xff]
        %v1704 = vld [vmem:[%s10 + $0x8] sm:$0xff]
        %v1705 = vld [vmem:[%s10 + $0x10] sm:$0xff]
        %v1706 = vld [vmem:[%s10 + $0x18] sm:$0xff]
        %v1707 = vld [vmem:[%s11] sm:$0x1]
        %v1709 = vlaneseq
        %v1710 = vshrl.u32 %v1709, 7
        %v1711 = vsub.s32 0, %v1710
        %v1712 = vrot.slane %v1707, %v1711
        %v1715 = vsel %vm985, %v1671, 0
        %v1718 = vsel %vm985, %v1672, 0
        %v1721 = vsel %vm985, %v1673, 0
        %v1724 = vsel %vm985, %v1674, 0
        %v1727 = vsel %vm985, %v1675, 0
        %v1730 = vsel %vm985, %v1676, 0
        %v1733 = vsel %vm985, %v1677, 0
        %v1736 = vsel %vm985, %v1678, 0
        %v1739 = vsel %vm985, %v1679, 0
        %v1742 = vsel %vm985, %v1680, 0
        %v1745 = vsel %vm985, %v1681, 0
        %v1748 = vsel %vm985, %v1682, 0
        %v1751 = vsel %vm985, %v1683, 0
        %v1754 = vsel %vm985, %v1684, 0
        %v1757 = vsel %vm985, %v1685, 0
        %v1760 = vsel %vm985, %v1686, 0
        %v1763 = vsel %vm985, %v1687, 0
        %v1766 = vsel %vm985, %v1688, 0
        %v1769 = vsel %vm985, %v1689, 0
        %v1772 = vsel %vm985, %v1690, 0
        %v1775 = vsel %vm985, %v1691, 0
        %v1778 = vsel %vm985, %v1692, 0
        %v1781 = vsel %vm985, %v1693, 0
        %v1784 = vsel %vm985, %v1694, 0
        %v1787 = vsel %vm985, %v1695, 0
        %v1790 = vsel %vm985, %v1696, 0
        %v1793 = vsel %vm985, %v1697, 0
        %v1796 = vsel %vm985, %v1698, 0
        %v1799 = vsel %vm985, %v1699, 0
        %v1802 = vsel %vm985, %v1700, 0
        %v1805 = vsel %vm985, %v1701, 0
        %v1808 = vsel %vm985, %v1702, 0
        %1810 = vmatprep.subr.mxu0 0.0
        %1811 = vmatpush1.msra.mxu0 %v1703
        %1812 = vmatprep.subr.mxu0 0.0
        %1813 = vmatpush1.msra.mxu0 %v1704
        %1814 = vmatprep.subr.mxu0 0.0
        %1815 = vmatpush1.msra.mxu0 %v1705
        %1816 = vmatprep.subr.mxu0 0.0
        %1817 = vmatpush1.msra.mxu0 %v1706
        %1818 = vmatprep.subr.mxu0 0.0
        %1819 = vmatpush1.msra.mxu0 0.0
        %1820 = vmatprep.subr.mxu0 0.0
        %1821 = vmatpush1.msra.mxu0 0.0
        %1822 = vmatprep.subr.mxu0 0.0
        %1823 = vmatpush1.msra.mxu0 0.0
        %1824 = vmatprep.subr.mxu0 0.0
        %1825 = vmatpush1.msra.mxu0 0.0
        %1826 = vmatprep.subr.mxu0 0.0
        %1827 = vmatpush1.msra.mxu0 0.0
        %1828 = vmatprep.subr.mxu0 0.0
        %1829 = vmatpush1.msra.mxu0 0.0
        %1830 = vmatprep.subr.mxu0 0.0
        %1831 = vmatpush1.msra.mxu0 0.0
        %1832 = vmatprep.subr.mxu0 0.0
        %1833 = vmatpush1.msra.mxu0 0.0
        %1834 = vmatprep.subr.mxu0 0.0
        %1835 = vmatpush1.msra.mxu0 0.0
        %1836 = vmatprep.subr.mxu0 0.0
        %1837 = vmatpush1.msra.mxu0 0.0
        %1838 = vmatprep.subr.mxu0 0.0
        %1839 = vmatpush1.msra.mxu0 0.0
        %1840 = vmatprep.subr.mxu0 0.0
        %1841 = vmatpush1.msra.mxu0 0.0
        %1842 = vmatprep.subr.mxu0 0.0
        %1843 = vmatpush1.msra.mxu0 0.0
        %1844 = vmatprep.subr.mxu0 0.0
        %1845 = vmatpush1.msra.mxu0 0.0
        %1846 = vmatprep.subr.mxu0 0.0
        %1847 = vmatpush1.msra.mxu0 0.0
        %1848 = vmatprep.subr.mxu0 0.0
        %1849 = vmatpush1.msra.mxu0 0.0
        %1850 = vmatprep.subr.mxu0 0.0
        %1851 = vmatpush1.msra.mxu0 0.0
        %1852 = vmatprep.subr.mxu0 0.0
        %1853 = vmatpush1.msra.mxu0 0.0
        %1854 = vmatprep.subr.mxu0 0.0
        %1855 = vmatpush1.msra.mxu0 0.0
        %1856 = vmatprep.subr.mxu0 0.0
        %1857 = vmatpush1.msra.mxu0 0.0
        %1858 = vmatprep.subr.mxu0 0.0
        %1859 = vmatpush1.msra.mxu0 0.0
        %1860 = vmatprep.subr.mxu0 0.0
        %1861 = vmatpush1.msra.mxu0 0.0
        %1862 = vmatprep.subr.mxu0 0.0
        %1863 = vmatpush1.msra.mxu0 0.0
        %1864 = vmatprep.subr.mxu0 0.0
        %1865 = vmatpush1.msra.mxu0 0.0
        %1866 = vmatprep.subr.mxu0 0.0
        %1867 = vmatpush1.msra.mxu0 0.0
        %1868 = vmatprep.subr.mxu0 0.0
        %1869 = vmatpush1.msra.mxu0 0.0
        %1870 = vmatprep.subr.mxu0 0.0
        %1871 = vmatpush1.msra.mxu0 0.0
        %1872 = vmatprep.subr.mxu0 0.0
        %1873 = vmatpush1.msra.mxu0 0.0
        %1874 = vmatprep.mubr.f32.mxu0 0.0
        %1875 = vmatmul.mubr.f32.gmra.mrb[0].mxu0 %v1715
        %v1876 = vpop.f32.mrb[0].mxu0
        %v1877 = vadd.f32 %v1712, %v1876
        %v1878 = vpop.f32.mrb[0].mxu0
        %1879 = vmatprep.mubr.f32.mxu0 0.0
        %1880 = vmatmul.mubr.f32.gmra.mrb[0].mxu0 %v1718
        %v1881 = vpop.f32.mrb[0].mxu0
        %v1882 = vadd.f32 %v1712, %v1881
        %v1883 = vpop.f32.mrb[0].mxu0
        %1884 = vmatprep.mubr.f32.mxu0 0.0
        %1885 = vmatmul.mubr.f32.gmra.mrb[0].mxu0 %v1721
        %v1886 = vpop.f32.mrb[0].mxu0
        %v1887 = vadd.f32 %v1712, %v1886
        %v1888 = vpop.f32.mrb[0].mxu0
        %1889 = vmatprep.mubr.f32.mxu0 0.0
        %1890 = vmatmul.mubr.f32.gmra.mrb[0].mxu0 %v1724
        %v1891 = vpop.f32.mrb[0].mxu0
        %v1892 = vadd.f32 %v1712, %v1891
        %v1893 = vpop.f32.mrb[0].mxu0
        %1894 = vmatprep.mubr.f32.mxu0 0.0
        %1895 = vmatmul.mubr.f32.gmra.mrb[0].mxu0 %v1727
        %v1896 = vpop.f32.mrb[0].mxu0
        %v1897 = vadd.f32 %v1712, %v1896
        %v1898 = vpop.f32.mrb[0].mxu0
        %1899 = vmatprep.mubr.f32.mxu0 0.0
        %1900 = vmatmul.mubr.f32.gmra.mrb[0].mxu0 %v1730
        %v1901 = vpop.f32.mrb[0].mxu0
        %v1902 = vadd.f32 %v1712, %v1901
        %v1903 = vpop.f32.mrb[0].mxu0
        %1904 = vmatprep.mubr.f32.mxu0 0.0
        %1905 = vmatmul.mubr.f32.gmra.mrb[0].mxu0 %v1733
        %v1906 = vpop.f32.mrb[0].mxu0
        %v1907 = vadd.f32 %v1712, %v1906
        %v1908 = vpop.f32.mrb[0].mxu0
        %1909 = vmatprep.mubr.f32.mxu0 0.0
        %1910 = vmatmul.mubr.f32.gmra.mrb[0].mxu0 %v1736
        %v1911 = vpop.f32.mrb[0].mxu0
        %v1912 = vadd.f32 %v1712, %v1911
        %v1913 = vpop.f32.mrb[0].mxu0
        %1914 = vmatprep.mubr.f32.mxu0 0.0
        %1915 = vmatmul.mubr.f32.gmra.mrb[0].mxu0 %v1739
        %v1916 = vpop.f32.mrb[0].mxu0
        %v1917 = vadd.f32 %v1712, %v1916
        %v1918 = vpop.f32.mrb[0].mxu0
        %1919 = vmatprep.mubr.f32.mxu0 0.0
        %1920 = vmatmul.mubr.f32.gmra.mrb[0].mxu0 %v1742
        %v1921 = vpop.f32.mrb[0].mxu0
        %v1922 = vadd.f32 %v1712, %v1921
        %v1923 = vpop.f32.mrb[0].mxu0
        %1924 = vmatprep.mubr.f32.mxu0 0.0
        %1925 = vmatmul.mubr.f32.gmra.mrb[0].mxu0 %v1745
        %v1926 = vpop.f32.mrb[0].mxu0
        %v1927 = vadd.f32 %v1712, %v1926
        %v1928 = vpop.f32.mrb[0].mxu0
        %1929 = vmatprep.mubr.f32.mxu0 0.0
        %1930 = vmatmul.mubr.f32.gmra.mrb[0].mxu0 %v1748
        %v1931 = vpop.f32.mrb[0].mxu0
        %v1932 = vadd.f32 %v1712, %v1931
        %v1933 = vpop.f32.mrb[0].mxu0
        %1934 = vmatprep.mubr.f32.mxu0 0.0
        %1935 = vmatmul.mubr.f32.gmra.mrb[0].mxu0 %v1751
        %v1936 = vpop.f32.mrb[0].mxu0
        %v1937 = vadd.f32 %v1712, %v1936
        %v1938 = vpop.f32.mrb[0].mxu0
        %1939 = vmatprep.mubr.f32.mxu0 0.0
        %1940 = vmatmul.mubr.f32.gmra.mrb[0].mxu0 %v1754
        %v1941 = vpop.f32.mrb[0].mxu0
        %v1942 = vadd.f32 %v1712, %v1941
        %v1943 = vpop.f32.mrb[0].mxu0
        %1944 = vmatprep.mubr.f32.mxu0 0.0
        %1945 = vmatmul.mubr.f32.gmra.mrb[0].mxu0 %v1757
        %v1946 = vpop.f32.mrb[0].mxu0
        %v1947 = vadd.f32 %v1712, %v1946
        %v1948 = vpop.f32.mrb[0].mxu0
        %1949 = vmatprep.mubr.f32.mxu0 0.0
        %1950 = vmatmul.mubr.f32.gmra.mrb[0].mxu0 %v1760
        %v1951 = vpop.f32.mrb[0].mxu0
        %v1952 = vadd.f32 %v1712, %v1951
        %v1953 = vpop.f32.mrb[0].mxu0
        %1954 = vmatprep.mubr.f32.mxu0 0.0
        %1955 = vmatmul.mubr.f32.gmra.mrb[0].mxu0 %v1763
        %v1956 = vpop.f32.mrb[0].mxu0
        %v1957 = vadd.f32 %v1712, %v1956
        %v1958 = vpop.f32.mrb[0].mxu0
        %1959 = vmatprep.mubr.f32.mxu0 0.0
        %1960 = vmatmul.mubr.f32.gmra.mrb[0].mxu0 %v1766
        %v1961 = vpop.f32.mrb[0].mxu0
        %v1962 = vadd.f32 %v1712, %v1961
        %v1963 = vpop.f32.mrb[0].mxu0
        %1964 = vmatprep.mubr.f32.mxu0 0.0
        %1965 = vmatmul.mubr.f32.gmra.mrb[0].mxu0 %v1769
        %v1966 = vpop.f32.mrb[0].mxu0
        %v1967 = vadd.f32 %v1712, %v1966
        %v1968 = vpop.f32.mrb[0].mxu0
        %1969 = vmatprep.mubr.f32.mxu0 0.0
        %1970 = vmatmul.mubr.f32.gmra.mrb[0].mxu0 %v1772
        %v1971 = vpop.f32.mrb[0].mxu0
        %v1972 = vadd.f32 %v1712, %v1971
        %v1973 = vpop.f32.mrb[0].mxu0
        %1974 = vmatprep.mubr.f32.mxu0 0.0
        %1975 = vmatmul.mubr.f32.gmra.mrb[0].mxu0 %v1775
        %v1976 = vpop.f32.mrb[0].mxu0
        %v1977 = vadd.f32 %v1712, %v1976
        %v1978 = vpop.f32.mrb[0].mxu0
        %1979 = vmatprep.mubr.f32.mxu0 0.0
        %1980 = vmatmul.mubr.f32.gmra.mrb[0].mxu0 %v1778
        %v1981 = vpop.f32.mrb[0].mxu0
        %v1982 = vadd.f32 %v1712, %v1981
        %v1983 = vpop.f32.mrb[0].mxu0
        %1984 = vmatprep.mubr.f32.mxu0 0.0
        %1985 = vmatmul.mubr.f32.gmra.mrb[0].mxu0 %v1781
        %v1986 = vpop.f32.mrb[0].mxu0
        %v1987 = vadd.f32 %v1712, %v1986
        %v1988 = vpop.f32.mrb[0].mxu0
        %1989 = vmatprep.mubr.f32.mxu0 0.0
        %1990 = vmatmul.mubr.f32.gmra.mrb[0].mxu0 %v1784
        %v1991 = vpop.f32.mrb[0].mxu0
        %v1992 = vadd.f32 %v1712, %v1991
        %v1993 = vpop.f32.mrb[0].mxu0
        %1994 = vmatprep.mubr.f32.mxu0 0.0
        %1995 = vmatmul.mubr.f32.gmra.mrb[0].mxu0 %v1787
        %v1996 = vpop.f32.mrb[0].mxu0
        %v1997 = vadd.f32 %v1712, %v1996
        %v1998 = vpop.f32.mrb[0].mxu0
        %1999 = vmatprep.mubr.f32.mxu0 0.0
        %2000 = vmatmul.mubr.f32.gmra.mrb[0].mxu0 %v1790
        %v2001 = vpop.f32.mrb[0].mxu0
        %v2002 = vadd.f32 %v1712, %v2001
        %v2003 = vpop.f32.mrb[0].mxu0
        %2004 = vmatprep.mubr.f32.mxu0 0.0
        %2005 = vmatmul.mubr.f32.gmra.mrb[0].mxu0 %v1793
        %v2006 = vpop.f32.mrb[0].mxu0
        %v2007 = vadd.f32 %v1712, %v2006
        %v2008 = vpop.f32.mrb[0].mxu0
        %2009 = vmatprep.mubr.f32.mxu0 0.0
        %2010 = vmatmul.mubr.f32.gmra.mrb[0].mxu0 %v1796
        %v2011 = vpop.f32.mrb[0].mxu0
        %v2012 = vadd.f32 %v1712, %v2011
        %v2013 = vpop.f32.mrb[0].mxu0
        %2014 = vmatprep.mubr.f32.mxu0 0.0
        %2015 = vmatmul.mubr.f32.gmra.mrb[0].mxu0 %v1799
        %v2016 = vpop.f32.mrb[0].mxu0
        %v2017 = vadd.f32 %v1712, %v2016
        %v2018 = vpop.f32.mrb[0].mxu0
        %2019 = vmatprep.mubr.f32.mxu0 0.0
        %2020 = vmatmul.mubr.f32.gmra.mrb[0].mxu0 %v1802
        %v2021 = vpop.f32.mrb[0].mxu0
        %v2022 = vadd.f32 %v1712, %v2021
        %v2023 = vpop.f32.mrb[0].mxu0
        %2024 = vmatprep.mubr.f32.mxu0 0.0
        %2025 = vmatmul.mubr.f32.gmra.mrb[0].mxu0 %v1805
        %v2026 = vpop.f32.mrb[0].mxu0
        %v2027 = vadd.f32 %v1712, %v2026
        %v2028 = vpop.f32.mrb[0].mxu0
        %2029 = vmatprep.mubr.f32.mxu0 0.0
        %2030 = vmatmul.mubr.f32.gmra.mrb[0].mxu0 %v1808
        %v2031 = vpop.f32.mrb[0].mxu0
        %v2032 = vadd.f32 %v1712, %v2031
        %v2033 = vpop.f32.mrb[0].mxu0
        %2034 = vdwg.mxu0
        %v2035 = vtanh.pop %v1877
        %v2036 = vtanh.pop %v1882
        %v2037 = vtanh.pop %v1887
        %v2038 = vtanh.pop %v1892
        %v2039 = vtanh.pop %v1897
        %v2040 = vtanh.pop %v1902
        %v2041 = vtanh.pop %v1907
        %v2042 = vtanh.pop %v1912
        %v2043 = vtanh.pop %v1917
        %v2044 = vtanh.pop %v1922
        %v2045 = vtanh.pop %v1927
        %v2046 = vtanh.pop %v1932
        %v2047 = vtanh.pop %v1937
        %v2048 = vtanh.pop %v1942
        %v2049 = vtanh.pop %v1947
        %v2050 = vtanh.pop %v1952
        %v2051 = vtanh.pop %v1957
        %v2052 = vtanh.pop %v1962
        %v2053 = vtanh.pop %v1967
        %v2054 = vtanh.pop %v1972
        %v2055 = vtanh.pop %v1977
        %v2056 = vtanh.pop %v1982
        %v2057 = vtanh.pop %v1987
        %v2058 = vtanh.pop %v1992
        %v2059 = vtanh.pop %v1997
        %v2060 = vtanh.pop %v2002
        %v2061 = vtanh.pop %v2007
        %v2062 = vtanh.pop %v2012
        %v2063 = vtanh.pop %v2017
        %v2064 = vtanh.pop %v2022
        %v2065 = vtanh.pop %v2027
        %v2066 = vtanh.pop %v2032
        %v2067 = vld [vmem:[%s456] sm:$0xff]
        %v2068 = vld [vmem:[%s456 + $0x8] sm:$0xff]
        %v2069 = vld [vmem:[%s456 + $0x10] sm:$0xff]
        %v2070 = vld [vmem:[%s456 + $0x18] sm:$0xff]
        %v2071 = vld [vmem:[%s456 + $0x20] sm:$0xff]
        %v2072 = vld [vmem:[%s456 + $0x28] sm:$0xff]
        %v2073 = vld [vmem:[%s456 + $0x30] sm:$0xff]
        %v2074 = vld [vmem:[%s456 + $0x38] sm:$0xff]
        %v2075 = vld [vmem:[%s456 + $0x40] sm:$0xff]
        %v2076 = vld [vmem:[%s456 + $0x48] sm:$0xff]
        %v2077 = vld [vmem:[%s456 + $0x50] sm:$0xff]
        %v2078 = vld [vmem:[%s456 + $0x58] sm:$0xff]
        %v2079 = vld [vmem:[%s456 + $0x60] sm:$0xff]
        %v2080 = vld [vmem:[%s456 + $0x68] sm:$0xff]
        %v2081 = vld [vmem:[%s456 + $0x70] sm:$0xff]
        %v2082 = vld [vmem:[%s456 + $0x78] sm:$0xff]
        %v2083 = vld [vmem:[%s456 + $0x80] sm:$0xff]
        %v2084 = vld [vmem:[%s456 + $0x88] sm:$0xff]
        %v2085 = vld [vmem:[%s456 + $0x90] sm:$0xff]
        %v2086 = vld [vmem:[%s456 + $0x98] sm:$0xff]
        %v2087 = vld [vmem:[%s456 + $0xa0] sm:$0xff]
        %v2088 = vld [vmem:[%s456 + $0xa8] sm:$0xff]
        %v2089 = vld [vmem:[%s456 + $0xb0] sm:$0xff]
        %v2090 = vld [vmem:[%s456 + $0xb8] sm:$0xff]
        %v2091 = vld [vmem:[%s456 + $0xc0] sm:$0xff]
        %v2092 = vld [vmem:[%s456 + $0xc8] sm:$0xff]
        %v2093 = vld [vmem:[%s456 + $0xd0] sm:$0xff]
        %v2094 = vld [vmem:[%s456 + $0xd8] sm:$0xff]
        %v2095 = vld [vmem:[%s456 + $0xe0] sm:$0xff]
        %v2096 = vld [vmem:[%s456 + $0xe8] sm:$0xff]
        %v2097 = vld [vmem:[%s456 + $0xf0] sm:$0xff]
        %v2098 = vld [vmem:[%s456 + $0xf8] sm:$0xff]
        %v2099 = vld [vmem:[%s2] sm:$0xff]
        %v2100 = vld [vmem:[%s2 + $0x8] sm:$0xff]
        %v2101 = vld [vmem:[%s2 + $0x10] sm:$0xff]
        %v2102 = vld [vmem:[%s2 + $0x18] sm:$0xff]
        %v2104 = vsel %vm985, %v2067, 0
        %v2107 = vsel %vm985, %v2068, 0
        %v2110 = vsel %vm985, %v2069, 0
        %v2113 = vsel %vm985, %v2070, 0
        %v2116 = vsel %vm985, %v2071, 0
        %v2119 = vsel %vm985, %v2072, 0
        %v2122 = vsel %vm985, %v2073, 0
        %v2125 = vsel %vm985, %v2074, 0
        %v2128 = vsel %vm985, %v2075, 0
        %v2131 = vsel %vm985, %v2076, 0
        %v2134 = vsel %vm985, %v2077, 0
        %v2137 = vsel %vm985, %v2078, 0
        %v2140 = vsel %vm985, %v2079, 0
        %v2143 = vsel %vm985, %v2080, 0
        %v2146 = vsel %vm985, %v2081, 0
        %v2149 = vsel %vm985, %v2082, 0
        %v2152 = vsel %vm985, %v2083, 0
        %v2155 = vsel %vm985, %v2084, 0
        %v2158 = vsel %vm985, %v2085, 0
        %v2161 = vsel %vm985, %v2086, 0
        %v2164 = vsel %vm985, %v2087, 0
        %v2167 = vsel %vm985, %v2088, 0
        %v2170 = vsel %vm985, %v2089, 0
        %v2173 = vsel %vm985, %v2090, 0
        %v2176 = vsel %vm985, %v2091, 0
        %v2179 = vsel %vm985, %v2092, 0
        %v2182 = vsel %vm985, %v2093, 0
        %v2185 = vsel %vm985, %v2094, 0
        %v2188 = vsel %vm985, %v2095, 0
        %v2191 = vsel %vm985, %v2096, 0
        %v2194 = vsel %vm985, %v2097, 0
        %v2197 = vsel %vm985, %v2098, 0
        %2199 = vmatprep.subr.mxu0 0.0
        %2200 = vmatpush1.msra.mxu0 %v2099
        %2201 = vmatprep.subr.mxu0 0.0
        %2202 = vmatpush1.msra.mxu0 %v2100
        %2203 = vmatprep.subr.mxu0 0.0
        %2204 = vmatpush1.msra.mxu0 %v2101
        %2205 = vmatprep.subr.mxu0 0.0
        %2206 = vmatpush1.msra.mxu0 %v2102
        %2207 = vmatprep.subr.mxu0 0.0
        %2208 = vmatpush1.msra.mxu0 0.0
        %2209 = vmatprep.subr.mxu0 0.0
        %2210 = vmatpush1.msra.mxu0 0.0
        %2211 = vmatprep.subr.mxu0 0.0
        %2212 = vmatpush1.msra.mxu0 0.0
        %2213 = vmatprep.subr.mxu0 0.0
        %2214 = vmatpush1.msra.mxu0 0.0
        %2215 = vmatprep.subr.mxu0 0.0
        %2216 = vmatpush1.msra.mxu0 0.0
        %2217 = vmatprep.subr.mxu0 0.0
        %2218 = vmatpush1.msra.mxu0 0.0
        %2219 = vmatprep.subr.mxu0 0.0
        %2220 = vmatpush1.msra.mxu0 0.0
        %2221 = vmatprep.subr.mxu0 0.0
        %2222 = vmatpush1.msra.mxu0 0.0
        %2223 = vmatprep.subr.mxu0 0.0
        %2224 = vmatpush1.msra.mxu0 0.0
        %2225 = vmatprep.subr.mxu0 0.0
        %2226 = vmatpush1.msra.mxu0 0.0
        %2227 = vmatprep.subr.mxu0 0.0
        %2228 = vmatpush1.msra.mxu0 0.0
        %2229 = vmatprep.subr.mxu0 0.0
        %2230 = vmatpush1.msra.mxu0 0.0
        %2231 = vmatprep.subr.mxu0 0.0
        %2232 = vmatpush1.msra.mxu0 0.0
        %2233 = vmatprep.subr.mxu0 0.0
        %2234 = vmatpush1.msra.mxu0 0.0
        %2235 = vmatprep.subr.mxu0 0.0
        %2236 = vmatpush1.msra.mxu0 0.0
        %2237 = vmatprep.subr.mxu0 0.0
        %2238 = vmatpush1.msra.mxu0 0.0
        %2239 = vmatprep.subr.mxu0 0.0
        %2240 = vmatpush1.msra.mxu0 0.0
        %2241 = vmatprep.subr.mxu0 0.0
        %2242 = vmatpush1.msra.mxu0 0.0
        %2243 = vmatprep.subr.mxu0 0.0
        %2244 = vmatpush1.msra.mxu0 0.0
        %2245 = vmatprep.subr.mxu0 0.0
        %2246 = vmatpush1.msra.mxu0 0.0
        %2247 = vmatprep.subr.mxu0 0.0
        %2248 = vmatpush1.msra.mxu0 0.0
        %2249 = vmatprep.subr.mxu0 0.0
        %2250 = vmatpush1.msra.mxu0 0.0
        %2251 = vmatprep.subr.mxu0 0.0
        %2252 = vmatpush1.msra.mxu0 0.0
        %2253 = vmatprep.subr.mxu0 0.0
        %2254 = vmatpush1.msra.mxu0 0.0
        %2255 = vmatprep.subr.mxu0 0.0
        %2256 = vmatpush1.msra.mxu0 0.0
        %2257 = vmatprep.subr.mxu0 0.0
        %2258 = vmatpush1.msra.mxu0 0.0
        %2259 = vmatprep.subr.mxu0 0.0
        %2260 = vmatpush1.msra.mxu0 0.0
        %2261 = vmatprep.subr.mxu0 0.0
        %2262 = vmatpush1.msra.mxu0 0.0
        %2263 = vmatprep.mubr.f32.mxu0 0.0
        %2264 = vmatmul.mubr.f32.gmra.mrb[0].mxu0 %v2104
        %v2265 = vpop.f32.mrb[0].mxu0
        %v2266 = vadd.f32 0.0, %v2265
        %v2267 = vpop.f32.mrb[0].mxu0
        %2268 = vmatprep.mubr.f32.mxu0 0.0
        %2269 = vmatmul.mubr.f32.gmra.mrb[0].mxu0 %v2107
        %v2270 = vpop.f32.mrb[0].mxu0
        %v2271 = vadd.f32 0.0, %v2270
        %v2272 = vpop.f32.mrb[0].mxu0
        %2273 = vmatprep.mubr.f32.mxu0 0.0
        %2274 = vmatmul.mubr.f32.gmra.mrb[0].mxu0 %v2110
        %v2275 = vpop.f32.mrb[0].mxu0
        %v2276 = vadd.f32 0.0, %v2275
        %v2277 = vpop.f32.mrb[0].mxu0
        %2278 = vmatprep.mubr.f32.mxu0 0.0
        %2279 = vmatmul.mubr.f32.gmra.mrb[0].mxu0 %v2113
        %v2280 = vpop.f32.mrb[0].mxu0
        %v2281 = vadd.f32 0.0, %v2280
        %v2282 = vpop.f32.mrb[0].mxu0
        %2283 = vmatprep.mubr.f32.mxu0 0.0
        %2284 = vmatmul.mubr.f32.gmra.mrb[0].mxu0 %v2116
        %v2285 = vpop.f32.mrb[0].mxu0
        %v2286 = vadd.f32 0.0, %v2285
        %v2287 = vpop.f32.mrb[0].mxu0
        %2288 = vmatprep.mubr.f32.mxu0 0.0
        %2289 = vmatmul.mubr.f32.gmra.mrb[0].mxu0 %v2119
        %v2290 = vpop.f32.mrb[0].mxu0
        %v2291 = vadd.f32 0.0, %v2290
        %v2292 = vpop.f32.mrb[0].mxu0
        %2293 = vmatprep.mubr.f32.mxu0 0.0
        %2294 = vmatmul.mubr.f32.gmra.mrb[0].mxu0 %v2122
        %v2295 = vpop.f32.mrb[0].mxu0
        %v2296 = vadd.f32 0.0, %v2295
        %v2297 = vpop.f32.mrb[0].mxu0
        %2298 = vmatprep.mubr.f32.mxu0 0.0
        %2299 = vmatmul.mubr.f32.gmra.mrb[0].mxu0 %v2125
        %v2300 = vpop.f32.mrb[0].mxu0
        %v2301 = vadd.f32 0.0, %v2300
        %v2302 = vpop.f32.mrb[0].mxu0
        %2303 = vmatprep.mubr.f32.mxu0 0.0
        %2304 = vmatmul.mubr.f32.gmra.mrb[0].mxu0 %v2128
        %v2305 = vpop.f32.mrb[0].mxu0
        %v2306 = vadd.f32 0.0, %v2305
        %v2307 = vpop.f32.mrb[0].mxu0
        %2308 = vmatprep.mubr.f32.mxu0 0.0
        %2309 = vmatmul.mubr.f32.gmra.mrb[0].mxu0 %v2131
        %v2310 = vpop.f32.mrb[0].mxu0
        %v2311 = vadd.f32 0.0, %v2310
        %v2312 = vpop.f32.mrb[0].mxu0
        %2313 = vmatprep.mubr.f32.mxu0 0.0
        %2314 = vmatmul.mubr.f32.gmra.mrb[0].mxu0 %v2134
        %v2315 = vpop.f32.mrb[0].mxu0
        %v2316 = vadd.f32 0.0, %v2315
        %v2317 = vpop.f32.mrb[0].mxu0
        %2318 = vmatprep.mubr.f32.mxu0 0.0
        %2319 = vmatmul.mubr.f32.gmra.mrb[0].mxu0 %v2137
        %v2320 = vpop.f32.mrb[0].mxu0
        %v2321 = vadd.f32 0.0, %v2320
        %v2322 = vpop.f32.mrb[0].mxu0
        %2323 = vmatprep.mubr.f32.mxu0 0.0
        %2324 = vmatmul.mubr.f32.gmra.mrb[0].mxu0 %v2140
        %v2325 = vpop.f32.mrb[0].mxu0
        %v2326 = vadd.f32 0.0, %v2325
        %v2327 = vpop.f32.mrb[0].mxu0
        %2328 = vmatprep.mubr.f32.mxu0 0.0
        %2329 = vmatmul.mubr.f32.gmra.mrb[0].mxu0 %v2143
        %v2330 = vpop.f32.mrb[0].mxu0
        %v2331 = vadd.f32 0.0, %v2330
        %v2332 = vpop.f32.mrb[0].mxu0
        %2333 = vmatprep.mubr.f32.mxu0 0.0
        %2334 = vmatmul.mubr.f32.gmra.mrb[0].mxu0 %v2146
        %v2335 = vpop.f32.mrb[0].mxu0
        %v2336 = vadd.f32 0.0, %v2335
        %v2337 = vpop.f32.mrb[0].mxu0
        %2338 = vmatprep.mubr.f32.mxu0 0.0
        %2339 = vmatmul.mubr.f32.gmra.mrb[0].mxu0 %v2149
        %v2340 = vpop.f32.mrb[0].mxu0
        %v2341 = vadd.f32 0.0, %v2340
        %v2342 = vpop.f32.mrb[0].mxu0
        %2343 = vmatprep.mubr.f32.mxu0 0.0
        %2344 = vmatmul.mubr.f32.gmra.mrb[0].mxu0 %v2152
        %v2345 = vpop.f32.mrb[0].mxu0
        %v2346 = vadd.f32 0.0, %v2345
        %v2347 = vpop.f32.mrb[0].mxu0
        %2348 = vmatprep.mubr.f32.mxu0 0.0
        %2349 = vmatmul.mubr.f32.gmra.mrb[0].mxu0 %v2155
        %v2350 = vpop.f32.mrb[0].mxu0
        %v2351 = vadd.f32 0.0, %v2350
        %v2352 = vpop.f32.mrb[0].mxu0
        %2353 = vmatprep.mubr.f32.mxu0 0.0
        %2354 = vmatmul.mubr.f32.gmra.mrb[0].mxu0 %v2158
        %v2355 = vpop.f32.mrb[0].mxu0
        %v2356 = vadd.f32 0.0, %v2355
        %v2357 = vpop.f32.mrb[0].mxu0
        %2358 = vmatprep.mubr.f32.mxu0 0.0
        %2359 = vmatmul.mubr.f32.gmra.mrb[0].mxu0 %v2161
        %v2360 = vpop.f32.mrb[0].mxu0
        %v2361 = vadd.f32 0.0, %v2360
        %v2362 = vpop.f32.mrb[0].mxu0
        %2363 = vmatprep.mubr.f32.mxu0 0.0
        %2364 = vmatmul.mubr.f32.gmra.mrb[0].mxu0 %v2164
        %v2365 = vpop.f32.mrb[0].mxu0
        %v2366 = vadd.f32 0.0, %v2365
        %v2367 = vpop.f32.mrb[0].mxu0
        %2368 = vmatprep.mubr.f32.mxu0 0.0
        %2369 = vmatmul.mubr.f32.gmra.mrb[0].mxu0 %v2167
        %v2370 = vpop.f32.mrb[0].mxu0
        %v2371 = vadd.f32 0.0, %v2370
        %v2372 = vpop.f32.mrb[0].mxu0
        %2373 = vmatprep.mubr.f32.mxu0 0.0
        %2374 = vmatmul.mubr.f32.gmra.mrb[0].mxu0 %v2170
        %v2375 = vpop.f32.mrb[0].mxu0
        %v2376 = vadd.f32 0.0, %v2375
        %v2377 = vpop.f32.mrb[0].mxu0
        %2378 = vmatprep.mubr.f32.mxu0 0.0
        %2379 = vmatmul.mubr.f32.gmra.mrb[0].mxu0 %v2173
        %v2380 = vpop.f32.mrb[0].mxu0
        %v2381 = vadd.f32 0.0, %v2380
        %v2382 = vpop.f32.mrb[0].mxu0
        %2383 = vmatprep.mubr.f32.mxu0 0.0
        %2384 = vmatmul.mubr.f32.gmra.mrb[0].mxu0 %v2176
        %v2385 = vpop.f32.mrb[0].mxu0
        %v2386 = vadd.f32 0.0, %v2385
        %v2387 = vpop.f32.mrb[0].mxu0
        %2388 = vmatprep.mubr.f32.mxu0 0.0
        %2389 = vmatmul.mubr.f32.gmra.mrb[0].mxu0 %v2179
        %v2390 = vpop.f32.mrb[0].mxu0
        %v2391 = vadd.f32 0.0, %v2390
        %v2392 = vpop.f32.mrb[0].mxu0
        %2393 = vmatprep.mubr.f32.mxu0 0.0
        %2394 = vmatmul.mubr.f32.gmra.mrb[0].mxu0 %v2182
        %v2395 = vpop.f32.mrb[0].mxu0
        %v2396 = vadd.f32 0.0, %v2395
        %v2397 = vpop.f32.mrb[0].mxu0
        %2398 = vmatprep.mubr.f32.mxu0 0.0
        %2399 = vmatmul.mubr.f32.gmra.mrb[0].mxu0 %v2185
        %v2400 = vpop.f32.mrb[0].mxu0
        %v2401 = vadd.f32 0.0, %v2400
        %v2402 = vpop.f32.mrb[0].mxu0
        %2403 = vmatprep.mubr.f32.mxu0 0.0
        %2404 = vmatmul.mubr.f32.gmra.mrb[0].mxu0 %v2188
        %v2405 = vpop.f32.mrb[0].mxu0
        %v2406 = vadd.f32 0.0, %v2405
        %v2407 = vpop.f32.mrb[0].mxu0
        %2408 = vmatprep.mubr.f32.mxu0 0.0
        %2409 = vmatmul.mubr.f32.gmra.mrb[0].mxu0 %v2191
        %v2410 = vpop.f32.mrb[0].mxu0
        %v2411 = vadd.f32 0.0, %v2410
        %v2412 = vpop.f32.mrb[0].mxu0
        %2413 = vmatprep.mubr.f32.mxu0 0.0
        %2414 = vmatmul.mubr.f32.gmra.mrb[0].mxu0 %v2194
        %v2415 = vpop.f32.mrb[0].mxu0
        %v2416 = vadd.f32 0.0, %v2415
        %v2417 = vpop.f32.mrb[0].mxu0
        %2418 = vmatprep.mubr.f32.mxu0 0.0
        %2419 = vmatmul.mubr.f32.gmra.mrb[0].mxu0 %v2197
        %v2420 = vpop.f32.mrb[0].mxu0
        %v2421 = vadd.f32 0.0, %v2420
        %v2422 = vpop.f32.mrb[0].mxu0
        %2423 = vdwg.mxu0
        %v2424 = vmul.f32 %v2266, %v2035
        %v2425 = vmul.f32 %v2271, %v2036
        %v2426 = vmul.f32 %v2276, %v2037
        %v2427 = vmul.f32 %v2281, %v2038
        %v2428 = vmul.f32 %v2286, %v2039
        %v2429 = vmul.f32 %v2291, %v2040
        %v2430 = vmul.f32 %v2296, %v2041
        %v2431 = vmul.f32 %v2301, %v2042
        %v2432 = vmul.f32 %v2306, %v2043
        %v2433 = vmul.f32 %v2311, %v2044
        %v2434 = vmul.f32 %v2316, %v2045
        %v2435 = vmul.f32 %v2321, %v2046
        %v2436 = vmul.f32 %v2326, %v2047
        %v2437 = vmul.f32 %v2331, %v2048
        %v2438 = vmul.f32 %v2336, %v2049
        %v2439 = vmul.f32 %v2341, %v2050
        %v2440 = vmul.f32 %v2346, %v2051
        %v2441 = vmul.f32 %v2351, %v2052
        %v2442 = vmul.f32 %v2356, %v2053
        %v2443 = vmul.f32 %v2361, %v2054
        %v2444 = vmul.f32 %v2366, %v2055
        %v2445 = vmul.f32 %v2371, %v2056
        %v2446 = vmul.f32 %v2376, %v2057
        %v2447 = vmul.f32 %v2381, %v2058
        %v2448 = vmul.f32 %v2386, %v2059
        %v2449 = vmul.f32 %v2391, %v2060
        %v2450 = vmul.f32 %v2396, %v2061
        %v2451 = vmul.f32 %v2401, %v2062
        %v2452 = vmul.f32 %v2406, %v2063
        %v2453 = vmul.f32 %v2411, %v2064
        %v2454 = vmul.f32 %v2416, %v2065
        %v2455 = vmul.f32 %v2421, %v2066
        %v2456 = vld [vmem:[%s3] sm:$0x1]
        %v2458 = vsel %vm985, %v2456, 0
        %2460 = vmatprep.subr.mxu0 0.0
        %2461 = vmatpush1.xpose.msra.mxu0 %v2104
        %2462 = vmatprep.subr.mxu0 0.0
        %2463 = vmatpush1.xpose.msra.mxu0 %v2107
        %2464 = vmatprep.subr.mxu0 0.0
        %2465 = vmatpush1.xpose.msra.mxu0 %v2110
        %2466 = vmatprep.subr.mxu0 0.0
        %2467 = vmatpush1.xpose.msra.mxu0 %v2113
        %2468 = vmatprep.subr.mxu0 0.0
        %2469 = vmatpush1.xpose.msra.mxu0 %v2116
        %2470 = vmatprep.subr.mxu0 0.0
        %2471 = vmatpush1.xpose.msra.mxu0 %v2119
        %2472 = vmatprep.subr.mxu0 0.0
        %2473 = vmatpush1.xpose.msra.mxu0 %v2122
        %2474 = vmatprep.subr.mxu0 0.0
        %2475 = vmatpush1.xpose.msra.mxu0 %v2125
        %2476 = vmatprep.subr.mxu0 0.0
        %2477 = vmatpush1.xpose.msra.mxu0 %v2128
        %2478 = vmatprep.subr.mxu0 0.0
        %2479 = vmatpush1.xpose.msra.mxu0 %v2131
        %2480 = vmatprep.subr.mxu0 0.0
        %2481 = vmatpush1.xpose.msra.mxu0 %v2134
        %2482 = vmatprep.subr.mxu0 0.0
        %2483 = vmatpush1.xpose.msra.mxu0 %v2137
        %2484 = vmatprep.subr.mxu0 0.0
        %2485 = vmatpush1.xpose.msra.mxu0 %v2140
        %2486 = vmatprep.subr.mxu0 0.0
        %2487 = vmatpush1.xpose.msra.mxu0 %v2143
        %2488 = vmatprep.subr.mxu0 0.0
        %2489 = vmatpush1.xpose.msra.mxu0 %v2146
        %2490 = vmatprep.subr.mxu0 0.0
        %2491 = vmatpush1.xpose.msra.mxu0 %v2149
        %2492 = vmatprep.subr.mxu0 0.0
        %2493 = vmatpush1.xpose.msra.mxu0 %v2152
        %2494 = vmatprep.subr.mxu0 0.0
        %2495 = vmatpush1.xpose.msra.mxu0 %v2155
        %2496 = vmatprep.subr.mxu0 0.0
        %2497 = vmatpush1.xpose.msra.mxu0 %v2158
        %2498 = vmatprep.subr.mxu0 0.0
        %2499 = vmatpush1.xpose.msra.mxu0 %v2161
        %2500 = vmatprep.subr.mxu0 0.0
        %2501 = vmatpush1.xpose.msra.mxu0 %v2164
        %2502 = vmatprep.subr.mxu0 0.0
        %2503 = vmatpush1.xpose.msra.mxu0 %v2167
        %2504 = vmatprep.subr.mxu0 0.0
        %2505 = vmatpush1.xpose.msra.mxu0 %v2170
        %2506 = vmatprep.subr.mxu0 0.0
        %2507 = vmatpush1.xpose.msra.mxu0 %v2173
        %2508 = vmatprep.subr.mxu0 0.0
        %2509 = vmatpush1.xpose.msra.mxu0 %v2176
        %2510 = vmatprep.subr.mxu0 0.0
        %2511 = vmatpush1.xpose.msra.mxu0 %v2179
        %2512 = vmatprep.subr.mxu0 0.0
        %2513 = vmatpush1.xpose.msra.mxu0 %v2182
        %2514 = vmatprep.subr.mxu0 0.0
        %2515 = vmatpush1.xpose.msra.mxu0 %v2185
        %2516 = vmatprep.subr.mxu0 0.0
        %2517 = vmatpush1.xpose.msra.mxu0 %v2188
        %2518 = vmatprep.subr.mxu0 0.0
        %2519 = vmatpush1.xpose.msra.mxu0 %v2191
        %2520 = vmatprep.subr.mxu0 0.0
        %2521 = vmatpush1.xpose.msra.mxu0 %v2194
        %2522 = vmatprep.subr.mxu0 0.0
        %2523 = vmatpush1.xpose.msra.mxu0 %v2197
        %2524 = vmatprep.mubr.f32.mxu0 0.0
        %2525 = vmatmul.mubr.f32.gmra.mrb[0].mxu0 %v2458
        %v2526 = vpop.f32.mrb[0].mxu0
        %v2527 = vadd.f32 0.0, %v2526
        %v2528 = vpop.f32.mrb[0].mxu0
        %v2529 = vadd.f32 0.0, %v2528
        %2530 = vdwg.mxu0
        %v2532 = vsel %vm985, 1.0, 0
        %v2535 = vsel %vm985, %v2424, 0
        %v2538 = vsel %vm985, %v2425, 0
        %v2541 = vsel %vm985, %v2426, 0
        %v2544 = vsel %vm985, %v2427, 0
        %v2547 = vsel %vm985, %v2428, 0
        %v2550 = vsel %vm985, %v2429, 0
        %v2553 = vsel %vm985, %v2430, 0
        %v2556 = vsel %vm985, %v2431, 0
        %v2559 = vsel %vm985, %v2432, 0
        %v2562 = vsel %vm985, %v2433, 0
        %v2565 = vsel %vm985, %v2434, 0
        %v2568 = vsel %vm985, %v2435, 0
        %v2571 = vsel %vm985, %v2436, 0
        %v2574 = vsel %vm985, %v2437, 0
        %v2577 = vsel %vm985, %v2438, 0
        %v2580 = vsel %vm985, %v2439, 0
        %v2583 = vsel %vm985, %v2440, 0
        %v2586 = vsel %vm985, %v2441, 0
        %v2589 = vsel %vm985, %v2442, 0
        %v2592 = vsel %vm985, %v2443, 0
        %v2595 = vsel %vm985, %v2444, 0
        %v2598 = vsel %vm985, %v2445, 0
        %v2601 = vsel %vm985, %v2446, 0
        %v2604 = vsel %vm985, %v2447, 0
        %v2607 = vsel %vm985, %v2448, 0
        %v2610 = vsel %vm985, %v2449, 0
        %v2613 = vsel %vm985, %v2450, 0
        %v2616 = vsel %vm985, %v2451, 0
        %v2619 = vsel %vm985, %v2452, 0
        %v2622 = vsel %vm985, %v2453, 0
        %v2625 = vsel %vm985, %v2454, 0
        %v2628 = vsel %vm985, %v2455, 0
        %2630 = vmatprep.subr.mxu0 0.0
        %2631 = vmatpush1.xpose.msra.mxu0 %v2535
        %2632 = vmatprep.subr.mxu0 0.0
        %2633 = vmatpush1.xpose.msra.mxu0 %v2538
        %2634 = vmatprep.subr.mxu0 0.0
        %2635 = vmatpush1.xpose.msra.mxu0 %v2541
        %2636 = vmatprep.subr.mxu0 0.0
        %2637 = vmatpush1.xpose.msra.mxu0 %v2544
        %2638 = vmatprep.subr.mxu0 0.0
        %2639 = vmatpush1.xpose.msra.mxu0 %v2547
        %2640 = vmatprep.subr.mxu0 0.0
        %2641 = vmatpush1.xpose.msra.mxu0 %v2550
        %2642 = vmatprep.subr.mxu0 0.0
        %2643 = vmatpush1.xpose.msra.mxu0 %v2553
        %2644 = vmatprep.subr.mxu0 0.0
        %2645 = vmatpush1.xpose.msra.mxu0 %v2556
        %2646 = vmatprep.subr.mxu0 0.0
        %2647 = vmatpush1.xpose.msra.mxu0 %v2559
        %2648 = vmatprep.subr.mxu0 0.0
        %2649 = vmatpush1.xpose.msra.mxu0 %v2562
        %2650 = vmatprep.subr.mxu0 0.0
        %2651 = vmatpush1.xpose.msra.mxu0 %v2565
        %2652 = vmatprep.subr.mxu0 0.0
        %2653 = vmatpush1.xpose.msra.mxu0 %v2568
        %2654 = vmatprep.subr.mxu0 0.0
        %2655 = vmatpush1.xpose.msra.mxu0 %v2571
        %2656 = vmatprep.subr.mxu0 0.0
        %2657 = vmatpush1.xpose.msra.mxu0 %v2574
        %2658 = vmatprep.subr.mxu0 0.0
        %2659 = vmatpush1.xpose.msra.mxu0 %v2577
        %2660 = vmatprep.subr.mxu0 0.0
        %2661 = vmatpush1.xpose.msra.mxu0 %v2580
        %2662 = vmatprep.subr.mxu0 0.0
        %2663 = vmatpush1.xpose.msra.mxu0 %v2583
        %2664 = vmatprep.subr.mxu0 0.0
        %2665 = vmatpush1.xpose.msra.mxu0 %v2586
        %2666 = vmatprep.subr.mxu0 0.0
        %2667 = vmatpush1.xpose.msra.mxu0 %v2589
        %2668 = vmatprep.subr.mxu0 0.0
        %2669 = vmatpush1.xpose.msra.mxu0 %v2592
        %2670 = vmatprep.subr.mxu0 0.0
        %2671 = vmatpush1.xpose.msra.mxu0 %v2595
        %2672 = vmatprep.subr.mxu0 0.0
        %2673 = vmatpush1.xpose.msra.mxu0 %v2598
        %2674 = vmatprep.subr.mxu0 0.0
        %2675 = vmatpush1.xpose.msra.mxu0 %v2601
        %2676 = vmatprep.subr.mxu0 0.0
        %2677 = vmatpush1.xpose.msra.mxu0 %v2604
        %2678 = vmatprep.subr.mxu0 0.0
        %2679 = vmatpush1.xpose.msra.mxu0 %v2607
        %2680 = vmatprep.subr.mxu0 0.0
        %2681 = vmatpush1.xpose.msra.mxu0 %v2610
        %2682 = vmatprep.subr.mxu0 0.0
        %2683 = vmatpush1.xpose.msra.mxu0 %v2613
        %2684 = vmatprep.subr.mxu0 0.0
        %2685 = vmatpush1.xpose.msra.mxu0 %v2616
        %2686 = vmatprep.subr.mxu0 0.0
        %2687 = vmatpush1.xpose.msra.mxu0 %v2619
        %2688 = vmatprep.subr.mxu0 0.0
        %2689 = vmatpush1.xpose.msra.mxu0 %v2622
        %2690 = vmatprep.subr.mxu0 0.0
        %2691 = vmatpush1.xpose.msra.mxu0 %v2625
        %2692 = vmatprep.subr.mxu0 0.0
        %2693 = vmatpush1.xpose.msra.mxu0 %v2628
        %2694 = vmatprep.mubr.f32.mxu0 0.0
        %2695 = vmatmul.mubr.f32.gmra.mrb[0].mxu0 %v2532
        %v2696 = vpop.f32.mrb[0].mxu0
        %v2697 = vadd.f32 %v2527, %v2696
        %v2698 = vpop.f32.mrb[0].mxu0
        %v2699 = vadd.f32 %v2529, %v2698
        %2700 = vdwg.mxu0
        %v2703 = vcombine.low %v2697, %v2699
        %v2705 = vunpack.c.l.s4 1966171168
        %v2706 = vunpack.c.0.s8 %v2705
        %v2707 = vlaneseq
        %v2708 = vshrl.u32 %v2707, 7
        %v2709 = vsub.s32 %v2706, %v2708
        %v2710 = vrot.slane %v2703, %v2709
        %v2712 = vunpack.c.l.s4 1966171168
        %v2713 = vunpack.c.0.s8 %v2712
        %v2714 = vlaneseq
        %v2715 = vshrl.u32 %v2714, 7
        %v2716 = vsub.s32 %v2713, %v2715
        %v2717 = vrot.slane %v2710, %v2716
        %v2719 = vlaneseq
        %vm2720 = vcmp.ge.s32.totalorder %v2719, 0
        %vm2721 = vcmp.lt.s32.totalorder %v2719, 256
        %vm2722 = vmand %vm2720, %vm2721
        %2723 = vst.msk [vmem:[%s447] sm:$0x3] %vm2722, %v2717
        %s2724 = sand.u32 %s296, 1
        %s2725 = scalar_lea.sflag [#allocation3], %s2724
        %s2726 = sand.u32 %s296, 1
        %s2727 = smul.addr %s2726, 2
        %s2728 = scalar_lea.vmem [#allocation2], %s2727
        // Predicated region
        $region69: #{tpu_custom_call.1} parent=67 // pred_check
          %p2729 = pneg %p306
        $region70: #{tpu_custom_call.1} parent=67 // pred_check_branch
          %2731 = sbr.rel (%p2729) target = $region72
        $region71: #{tpu_custom_call.1} parent=67 // pred_region
          %s2732 = smul.u32 2, %s26
          %s2734 = ssub.s32 32, 32
          %2735 = vsyncadd %s2725, %s2734
          %s2736 = smul.addr %s2732, 16
          %s2737 = scalar_lea.hbm %s12, %s2736
          %s2739 = sshll.u32 %s2728, 4
          %s2740 = int_to_ptr.vmem [resolvable:$true] %s2739
          %2742 = dma.vmem_to_hbm [thread:$0]  %s2740, 32, %s2737, %s2725
        $region72: #{tpu_custom_call.1} parent=67 // pred_fallthru
          _
      $region68: #{tpu_custom_call.1} parent=5 // pred_fallthru
        _
      %p2743 = scmp.le.s32.totalorder 2, %s21
      // Predicated region
      $region73: #{tpu_custom_call.1} parent=5 // pred_check
        %p2744 = pneg %p2743
      $region74: #{tpu_custom_call.1} parent=5 // pred_check_branch
        %2746 = sbr.rel (%p2744) target = $region76
      $region75: #{tpu_custom_call.1} parent=5 // pred_region
        %s2747 = ssub.s32 %s21, 2
        // Predicated region
        $region77: #{tpu_custom_call.1} parent=75 // pred_check
          %p2748 = pneg %p312
        $region78: #{tpu_custom_call.1} parent=75 // pred_check_branch
          %2750 = sbr.rel (%p2748) target = $region80
        $region79: #{tpu_custom_call.1} parent=75 // pred_region
          %s2751 = sand.u32 %s297, 1
          %s2752 = scalar_lea.sflag [#allocation3], %s2751
          %s2753 = sand.u32 %s297, 1
          %s2754 = smul.addr %s2753, 2
          %s2755 = scalar_lea.vmem [#allocation2], %s2754
          %2756 = dma.done %s2752, 32
        $region80: #{tpu_custom_call.1} parent=75 // pred_fallthru
          _
      $region76: #{tpu_custom_call.1} parent=5 // pred_fallthru
        _
    $region6: #{tpu_custom_call.1} parent=1 // loop_footer
      %s25 = sadd.s32 1, %s21
    $region7: #{tpu_custom_call.1} parent=1 // loop_footer_branch
      %20 = sbr.rel target = $region3
    $region8: #{tpu_custom_call.1} parent=1 // loop_exit
      _
    %2757 = vsyncpa [#allocation3], 1
    %s2758 = scalar_lea.sflag [#allocation3], 1
    %2759 = vsyncpa %s2758, 1

</llo_original>
